<compile_context>
chip_gen: v7x
topology: tpu7x:2x2x1
jax: 0.10.0
libtpu: 0.0.40
codegen_flags: <defaults>
</compile_context>

<pallas_src>
import functools

import numpy as np
import jax
import jax.numpy as jnp
from jax.experimental import pallas as pl
from jax.experimental.pallas import tpu as pltpu


D_FEAT = 512          # input_sizes['microsoft/resnet-18']
N_CLASSES = 4
PAD_CLASSES = 128     # lane-dense output width (multiple of 128)
BN_EPS = 1e-5


def _pick_hw_tile(hw):
    """Largest multiple-of-128 divisor of hw (capped at 2048) that still gives
    >= 2 pipeline steps when possible; otherwise the full hw (block == full dim
    is always a legal block shape)."""
    if hw % 128 != 0:
        return hw
    best = 128 if hw > 128 else hw
    t = 128
    while t <= min(hw // 2, 2048):
        if hw % t == 0:
            best = t
        t += 128
    return best


def _fused_head_kernel(px_ref, wp_ref, bp_ref,
                       w1_ref, b1_ref, gamma_ref, beta_ref,
                       w3_ref, b3_ref,
                       logits_ref, probs_ref,
                       acc_ref, *, c_in, hw):
    t = pl.program_id(0)

    @pl.when(t == 0)
    def _init():
        acc_ref[...] = jnp.zeros_like(acc_ref)

    # ---- fused global-average-pool partial sums + backbone stand-in projection.
    # K = c_in (3) is far too small for the MXU, so the C->D projection is done
    # as c_in broadcast FMAs on the VPU, accumulated directly into [N, D].
    wp = wp_ref[...]                                        # [C, D]
    for c in range(c_in):
        chunk = px_ref[:, c, :]                             # [N, hw_tile] (ref slice)
        s_c = jnp.sum(chunk, axis=1, keepdims=True)         # [N, 1] partial pool sum
        acc_ref[...] += s_c * wp[c:c + 1, :]                # project partial sums

    @pl.when(t == pl.num_programs(0) - 1)
    def _finish():
        inv_hw = jnp.float32(1.0 / hw)
        # pooler-output ReLU and the head's first relu collapse (relu idempotent).
        feats = jnp.maximum(acc_ref[...] * inv_hw + bp_ref[...], 0.0)   # [N, D]

        # ---- linear1 on the MXU: bf16 operands, f32 accumulate ---------------
        h = jnp.dot(feats.astype(jnp.bfloat16), w1_ref[...],
                    preferred_element_type=jnp.float32) + b1_ref[...]

        # ---- BatchNorm1d (training-mode batch stats, biased var, eps=1e-5) ---
        # Two-pass variance (safer in f32), affine folded into one FMA.
        mean = jnp.mean(h, axis=0, keepdims=True)           # [1, D]
        centered = h - mean
        var = jnp.mean(centered * centered, axis=0, keepdims=True)
        scale = gamma_ref[...] * jax.lax.rsqrt(var + BN_EPS)
        shift = beta_ref[...] - mean * scale
        h = h * scale + shift

        # Dropout(p=0.1): identity (eval semantics).
        h = jnp.maximum(h, 0.0)                             # relu

        # ---- linear3 -> lane-dense padded logits [N, 128] ---------------------
        logits = jnp.dot(h.astype(jnp.bfloat16), w3_ref[...],
                         preferred_element_type=jnp.float32) + b3_ref[...]
        logits_ref[...] = logits

        # ---- softmax over the first N_CLASSES lanes only -----------------------
        lane = jax.lax.broadcasted_iota(jnp.int32, logits.shape, 1)
        valid = lane < N_CLASSES
        masked = jnp.where(valid, logits, jnp.float32(-1e30))
        m = jnp.max(masked, axis=1, keepdims=True)
        e = jnp.where(valid, jnp.exp(masked - m), 0.0)
        denom = jnp.sum(e, axis=1, keepdims=True)
        probs_ref[...] = e / denom                          # exact divide


@jax.jit
def head_forward(px3, params):
    """px3: [N, C, H*W] float32.  Returns (logits [N,4], probs [N,4])."""
    n, c_in, hw = px3.shape
    hw_tile = _pick_hw_tile(hw)
    steps = hw // hw_tile

    kernel = functools.partial(_fused_head_kernel, c_in=c_in, hw=hw)

    grid_spec = pltpu.PrefetchScalarGridSpec(
        num_scalar_prefetch=0,
        grid=(steps,),
        in_specs=[
            pl.BlockSpec((n, c_in, hw_tile), lambda t: (0, 0, t)),   # px tile
            pl.BlockSpec((c_in, D_FEAT), lambda t: (0, 0)),          # wp
            pl.BlockSpec((1, D_FEAT), lambda t: (0, 0)),             # bp
            pl.BlockSpec((D_FEAT, D_FEAT), lambda t: (0, 0)),        # w1 (bf16)
            pl.BlockSpec((1, D_FEAT), lambda t: (0, 0)),             # b1
            pl.BlockSpec((1, D_FEAT), lambda t: (0, 0)),             # gamma
            pl.BlockSpec((1, D_FEAT), lambda t: (0, 0)),             # beta
            pl.BlockSpec((D_FEAT, PAD_CLASSES), lambda t: (0, 0)),   # w3 (bf16)
            pl.BlockSpec((1, PAD_CLASSES), lambda t: (0, 0)),        # b3
        ],
        out_specs=(
            pl.BlockSpec((n, PAD_CLASSES), lambda t: (0, 0)),
            pl.BlockSpec((n, PAD_CLASSES), lambda t: (0, 0)),
        ),
        scratch_shapes=[pltpu.VMEM((n, D_FEAT), jnp.float32)],
    )

    logits_pad, probs_pad = pl.pallas_call(
        kernel,
        out_shape=(jax.ShapeDtypeStruct((n, PAD_CLASSES), jnp.float32),
                   jax.ShapeDtypeStruct((n, PAD_CLASSES), jnp.float32)),
        grid_spec=grid_spec,
        compiler_params=pltpu.CompilerParams(
            dimension_semantics=("arbitrary",),
            vmem_limit_bytes=32 * 1024 * 1024),
    )(px3,
      params["wp"], params["bp"],
      params["w1"], params["b1"],
      params["gamma"], params["beta"],
      params["w3"], params["b3"])

    # Slice the 4 real classes back out (padding existed only for lane-dense stores).
    return logits_pad[:, :N_CLASSES], probs_pad[:, :N_CLASSES]


def model_forward(pixel_values, params, nums_images=None, is_train=True):
    """Full forward.  pixel_values: NCHW [N, C, H, W] float32."""
    n, c, h, w = pixel_values.shape
    px3 = pixel_values.reshape(n, c, h * w)     # contiguous, free reshape
    logits, probs = head_forward(px3, params)
    if not is_train:
        # Per-sample mean aggregation over ragged groups of images:
        # single segment reduction instead of a Python loop of dynamic slices.
        nums = np.asarray(nums_images)
        seg_ids = jnp.asarray(np.repeat(np.arange(len(nums)), nums))
        sums = jax.ops.segment_sum(logits, seg_ids, num_segments=len(nums))
        logits = sums / jnp.asarray(nums, jnp.float32)[:, None]
        probs = jax.nn.softmax(logits, axis=1)
    return logits, probs


def init_params(key, c_in=3, d=D_FEAT, n_classes=N_CLASSES,
                pad_classes=PAD_CLASSES):
    ks = jax.random.split(key, 6)

    def lin(kw, kb, fan_in, fan_out):
        bound = 1.0 / jnp.sqrt(jnp.float32(fan_in))
        wgt = jax.random.uniform(kw, (fan_in, fan_out), jnp.float32, -bound, bound)
        b = jax.random.uniform(kb, (1, fan_out), jnp.float32, -bound, bound)
        return wgt, b

    wp, bp = lin(ks[0], ks[1], c_in, d)          # backbone stand-in projection
    w1, b1 = lin(ks[2], ks[3], d, d)             # nn.Linear(D, D)
    w3, b3 = lin(ks[4], ks[5], d, n_classes)     # nn.Linear(D, 4)

    # Zero-pad linear3 to lane-dense [D, 128] / [1, 128]; w3 in bf16 (halved DMA).
    w3_pad = jnp.zeros((d, pad_classes), jnp.float32).at[:, :n_classes].set(w3)
    b3_pad = jnp.zeros((1, pad_classes), jnp.float32).at[:, :n_classes].set(b3)

    return {
        "wp": wp, "bp": bp,
        "w1": w1.astype(jnp.bfloat16),            # bf16 weights, f32 accumulate
        "b1": b1,
        "gamma": jnp.ones((1, d), jnp.float32),   # BatchNorm1d weight
        "beta": jnp.zeros((1, d), jnp.float32),   # BatchNorm1d bias
        "w3": w3_pad.astype(jnp.bfloat16),
        "b3": b3_pad,
    }


if __name__ == "__main__":
    key = jax.random.PRNGKey(0)
    k_x, k_p = jax.random.split(key)

    N, C, H, W = 8, 3, 16, 16
    pixel_values = jax.random.normal(k_x, (N, C, H, W), jnp.float32)
    params = init_params(k_p, c_in=C)

    logits, probs = model_forward(pixel_values, params, is_train=True)
    logits = jax.block_until_ready(logits)
    probs = jax.block_until_ready(probs)

    assert logits.shape == (N, N_CLASSES)
    assert probs.shape == (N, N_CLASSES)
    assert bool(jnp.all(jnp.isfinite(logits)))
    assert bool(jnp.all(jnp.isfinite(probs)))
    assert bool(jnp.allclose(jnp.sum(probs, axis=1), 1.0, atol=1e-4))

    # Also exercise the eval-time per-sample aggregation path (segment mean).
    ev_logits, ev_probs = model_forward(pixel_values, params,
                                        nums_images=[3, 5], is_train=False)
    ev_probs = jax.block_until_ready(ev_probs)
    assert ev_logits.shape == (2, N_CLASSES)
    assert bool(jnp.allclose(jnp.sum(ev_probs, axis=1), 1.0, atol=1e-4))

    print("KERNEL_OK")
</pallas_src>

<mosaic_0001>
module attributes {stable_mosaic.version = 11 : i64} {
  func.func @_fused_head_kernel(%arg0: i32, %arg1: memref<8x3x128xf32, #tpu.memory_space<vmem>>, %arg2: memref<3x512xf32, #tpu.memory_space<vmem>>, %arg3: memref<1x512xf32, #tpu.memory_space<vmem>>, %arg4: memref<512x512xbf16, #tpu.memory_space<vmem>>, %arg5: memref<1x512xf32, #tpu.memory_space<vmem>>, %arg6: memref<1x512xf32, #tpu.memory_space<vmem>>, %arg7: memref<1x512xf32, #tpu.memory_space<vmem>>, %arg8: memref<512x128xbf16, #tpu.memory_space<vmem>>, %arg9: memref<1x128xf32, #tpu.memory_space<vmem>>, %arg10: memref<8x128xf32, #tpu.memory_space<vmem>>, %arg11: memref<8x128xf32, #tpu.memory_space<vmem>>, %arg12: memref<8x512xf32, #tpu.memory_space<vmem>>) attributes {dimension_semantics = [#tpu.dimension_semantics<arbitrary>], iteration_bounds = array<i64: 2>, scalar_prefetch = 0 : i64, scratch_operands = 1 : i64, tpu.core_type = #tpu.core_type<tc>, window_params = [{transform_indices = @transform_0, window_bounds = array<i64: 8, 3, 128>}, {pipeline_mode = #tpu.pipeline_mode<synchronous>, transform_indices = @transform_1, window_bounds = array<i64: 3, 512>}, {pipeline_mode = #tpu.pipeline_mode<synchronous>, transform_indices = @transform_2, window_bounds = array<i64: 1, 512>}, {pipeline_mode = #tpu.pipeline_mode<synchronous>, transform_indices = @transform_3, window_bounds = array<i64: 512, 512>}, {pipeline_mode = #tpu.pipeline_mode<synchronous>, transform_indices = @transform_4, window_bounds = array<i64: 1, 512>}, {pipeline_mode = #tpu.pipeline_mode<synchronous>, transform_indices = @transform_5, window_bounds = array<i64: 1, 512>}, {pipeline_mode = #tpu.pipeline_mode<synchronous>, transform_indices = @transform_6, window_bounds = array<i64: 1, 512>}, {pipeline_mode = #tpu.pipeline_mode<synchronous>, transform_indices = @transform_7, window_bounds = array<i64: 512, 128>}, {pipeline_mode = #tpu.pipeline_mode<synchronous>, transform_indices = @transform_8, window_bounds = array<i64: 1, 128>}, {pipeline_mode = #tpu.pipeline_mode<synchronous>, transform_indices = @transform_9, window_bounds = array<i64: 8, 128>}, {pipeline_mode = #tpu.pipeline_mode<synchronous>, transform_indices = @transform_10, window_bounds = array<i64: 8, 128>}]} {
    %c0_i32 = arith.constant 0 : i32
    %0 = arith.cmpi eq, %arg0, %c0_i32 : i32
    %1 = arith.extui %0 : i1 to i32
    %c0_i32_0 = arith.constant 0 : i32
    %2 = arith.cmpi ne, %1, %c0_i32_0 : i32
    scf.if %2 {
      %cst_24 = arith.constant 0.000000e+00 : f32
      %40 = vector.broadcast %cst_24 : f32 to vector<8x512xf32>
      %c0_25 = arith.constant 0 : index
      %c0_26 = arith.constant 0 : index
      %41 = vector.load %arg12[%c0_25, %c0_26] : memref<8x512xf32, #tpu.memory_space<vmem>>, vector<8x512xf32>
      tpu.vector_store %arg12[%c0_25, %c0_26], %40 {strides = array<i32>} : memref<8x512xf32, #tpu.memory_space<vmem>>, vector<8x512xf32>,
    } else {
    }
    %c0 = arith.constant 0 : index
    %c0_1 = arith.constant 0 : index
    %3 = vector.load %arg2[%c0, %c0_1] : memref<3x512xf32, #tpu.memory_space<vmem>>, vector<3x512xf32>
    %c0_2 = arith.constant 0 : index
    %c0_3 = arith.constant 0 : index
    %c0_4 = arith.constant 0 : index
    %4 = vector.load %arg1[%c0_2, %c0_3, %c0_4] : memref<8x3x128xf32, #tpu.memory_space<vmem>>, vector<8x1x128xf32>
    %5 = vector.shape_cast %4 : vector<8x1x128xf32> to vector<8x128xf32>
    %cst = arith.constant dense<0.000000e+00> : vector<8xf32>
    %6 = vector.multi_reduction <add>, %5, %cst [1] : vector<8x128xf32> to vector<8xf32>
    %7 = vector.shape_cast %6 : vector<8xf32> to vector<8x1xf32>
    %c0_5 = arith.constant 0 : index
    %c0_6 = arith.constant 0 : index
    %8 = vector.load %arg12[%c0_5, %c0_6] : memref<8x512xf32, #tpu.memory_space<vmem>>, vector<8x512xf32>
    %9 = vector.extract_strided_slice %3 {offsets = [0, 0], sizes = [1, 512], strides = [1, 1]} : vector<3x512xf32> to vector<1x512xf32>
    %10 = vector.broadcast %7 : vector<8x1xf32> to vector<8x512xf32>
    %11 = vector.broadcast %9 : vector<1x512xf32> to vector<8x512xf32>
    %12 = arith.mulf %10, %11 : vector<8x512xf32>
    %13 = arith.addf %8, %12 : vector<8x512xf32>
    %c0_7 = arith.constant 0 : index
    %c0_8 = arith.constant 0 : index
    %14 = vector.load %arg12[%c0_7, %c0_8] : memref<8x512xf32, #tpu.memory_space<vmem>>, vector<8x512xf32>
    tpu.vector_store %arg12[%c0_7, %c0_8], %13 {strides = array<i32>} : memref<8x512xf32, #tpu.memory_space<vmem>>, vector<8x512xf32>,
    %c0_9 = arith.constant 0 : index
    %c1 = arith.constant 1 : index
    %c0_10 = arith.constant 0 : index
    %15 = vector.load %arg1[%c0_9, %c1, %c0_10] : memref<8x3x128xf32, #tpu.memory_space<vmem>>, vector<8x1x128xf32>
    %16 = vector.shape_cast %15 : vector<8x1x128xf32> to vector<8x128xf32>
    %cst_11 = arith.constant dense<0.000000e+00> : vector<8xf32>
    %17 = vector.multi_reduction <add>, %16, %cst_11 [1] : vector<8x128xf32> to vector<8xf32>
    %18 = vector.shape_cast %17 : vector<8xf32> to vector<8x1xf32>
    %c0_12 = arith.constant 0 : index
    %c0_13 = arith.constant 0 : index
    %19 = vector.load %arg12[%c0_12, %c0_13] : memref<8x512xf32, #tpu.memory_space<vmem>>, vector<8x512xf32>
    %20 = vector.extract_strided_slice %3 {offsets = [1, 0], sizes = [1, 512], strides = [1, 1]} : vector<3x512xf32> to vector<1x512xf32>
    %21 = vector.broadcast %18 : vector<8x1xf32> to vector<8x512xf32>
    %22 = vector.broadcast %20 : vector<1x512xf32> to vector<8x512xf32>
    %23 = arith.mulf %21, %22 : vector<8x512xf32>
    %24 = arith.addf %19, %23 : vector<8x512xf32>
    %c0_14 = arith.constant 0 : index
    %c0_15 = arith.constant 0 : index
    %25 = vector.load %arg12[%c0_14, %c0_15] : memref<8x512xf32, #tpu.memory_space<vmem>>, vector<8x512xf32>
    tpu.vector_store %arg12[%c0_14, %c0_15], %24 {strides = array<i32>} : memref<8x512xf32, #tpu.memory_space<vmem>>, vector<8x512xf32>,
    %c0_16 = arith.constant 0 : index
    %c2 = arith.constant 2 : index
    %c0_17 = arith.constant 0 : index
    %26 = vector.load %arg1[%c0_16, %c2, %c0_17] : memref<8x3x128xf32, #tpu.memory_space<vmem>>, vector<8x1x128xf32>
    %27 = vector.shape_cast %26 : vector<8x1x128xf32> to vector<8x128xf32>
    %cst_18 = arith.constant dense<0.000000e+00> : vector<8xf32>
    %28 = vector.multi_reduction <add>, %27, %cst_18 [1] : vector<8x128xf32> to vector<8xf32>
    %29 = vector.shape_cast %28 : vector<8xf32> to vector<8x1xf32>
    %c0_19 = arith.constant 0 : index
    %c0_20 = arith.constant 0 : index
    %30 = vector.load %arg12[%c0_19, %c0_20] : memref<8x512xf32, #tpu.memory_space<vmem>>, vector<8x512xf32>
    %31 = vector.extract_strided_slice %3 {offsets = [2, 0], sizes = [1, 512], strides = [1, 1]} : vector<3x512xf32> to vector<1x512xf32>
    %32 = vector.broadcast %29 : vector<8x1xf32> to vector<8x512xf32>
    %33 = vector.broadcast %31 : vector<1x512xf32> to vector<8x512xf32>
    %34 = arith.mulf %32, %33 : vector<8x512xf32>
    %35 = arith.addf %30, %34 : vector<8x512xf32>
    %c0_21 = arith.constant 0 : index
    %c0_22 = arith.constant 0 : index
    %36 = vector.load %arg12[%c0_21, %c0_22] : memref<8x512xf32, #tpu.memory_space<vmem>>, vector<8x512xf32>
    tpu.vector_store %arg12[%c0_21, %c0_22], %35 {strides = array<i32>} : memref<8x512xf32, #tpu.memory_space<vmem>>, vector<8x512xf32>,
    %c1_i32 = arith.constant 1 : i32
    %37 = arith.cmpi eq, %arg0, %c1_i32 : i32
    %38 = arith.extui %37 : i1 to i32
    %c0_i32_23 = arith.constant 0 : i32
    %39 = arith.cmpi ne, %38, %c0_i32_23 : i32
    scf.if %39 {
      %c0_24 = arith.constant 0 : index
      %c0_25 = arith.constant 0 : index
      %40 = vector.load %arg12[%c0_24, %c0_25] : memref<8x512xf32, #tpu.memory_space<vmem>>, vector<8x512xf32>
      %cst_26 = arith.constant 3.906250e-03 : f32
      %41 = vector.broadcast %cst_26 : f32 to vector<8x512xf32>
      %42 = arith.mulf %40, %41 : vector<8x512xf32>
      %c0_27 = arith.constant 0 : index
      %c0_28 = arith.constant 0 : index
      %43 = vector.load %arg3[%c0_27, %c0_28] : memref<1x512xf32, #tpu.memory_space<vmem>>, vector<1x512xf32>
      %44 = vector.broadcast %43 : vector<1x512xf32> to vector<8x512xf32>
      %45 = arith.addf %42, %44 : vector<8x512xf32>
      %cst_29 = arith.constant 0.000000e+00 : f32
      %46 = vector.broadcast %cst_29 : f32 to vector<8x512xf32>
      %47 = arith.maximumf %45, %46 : vector<8x512xf32>
      %48 = arith.truncf %47 : vector<8x512xf32> to vector<8x512xbf16>
      %c0_30 = arith.constant 0 : index
      %c0_31 = arith.constant 0 : index
      %49 = vector.load %arg4[%c0_30, %c0_31] : memref<512x512xbf16, #tpu.memory_space<vmem>>, vector<512x512xbf16>
      %cst_32 = arith.constant dense<0.000000e+00> : vector<8x512xf32>
      %50 = tpu.matmul %48, %49, %cst_32 {dimension_numbers = #tpu.dot_dimension_numbers<[1], [0], [0], [1], [0, 0, 1, 1], [], []>} : vector<8x512xbf16>, vector<512x512xbf16>, vector<8x512xf32> -> vector<8x512xf32>
      %c0_33 = arith.constant 0 : index
      %c0_34 = arith.constant 0 : index
      %51 = vector.load %arg5[%c0_33, %c0_34] : memref<1x512xf32, #tpu.memory_space<vmem>>, vector<1x512xf32>
      %52 = vector.broadcast %51 : vector<1x512xf32> to vector<8x512xf32>
      %53 = arith.addf %50, %52 : vector<8x512xf32>
      %cst_35 = arith.constant dense<0.000000e+00> : vector<512xf32>
      %54 = vector.multi_reduction <add>, %53, %cst_35 [0] : vector<8x512xf32> to vector<512xf32>
      %55 = vector.shape_cast %54 : vector<512xf32> to vector<1x512xf32>
      %cst_36 = arith.constant 8.000000e+00 : f32
      %56 = vector.broadcast %cst_36 : f32 to vector<1x512xf32>
      %57 = arith.divf %55, %56 : vector<1x512xf32>
      %58 = vector.broadcast %57 : vector<1x512xf32> to vector<8x512xf32>
      %59 = arith.subf %53, %58 : vector<8x512xf32>
      %60 = arith.mulf %59, %59 : vector<8x512xf32>
      %cst_37 = arith.constant dense<0.000000e+00> : vector<512xf32>
      %61 = vector.multi_reduction <add>, %60, %cst_37 [0] : vector<8x512xf32> to vector<512xf32>
      %62 = vector.shape_cast %61 : vector<512xf32> to vector<1x512xf32>
      %cst_38 = arith.constant 8.000000e+00 : f32
      %63 = vector.broadcast %cst_38 : f32 to vector<1x512xf32>
      %64 = arith.divf %62, %63 : vector<1x512xf32>
      %c0_39 = arith.constant 0 : index
      %c0_40 = arith.constant 0 : index
      %65 = vector.load %arg6[%c0_39, %c0_40] : memref<1x512xf32, #tpu.memory_space<vmem>>, vector<1x512xf32>
      %cst_41 = arith.constant 9.99999974E-6 : f32
      %66 = vector.broadcast %cst_41 : f32 to vector<1x512xf32>
      %67 = arith.addf %64, %66 : vector<1x512xf32>
      %68 = math.rsqrt %67 : vector<1x512xf32>
      %69 = arith.mulf %65, %68 : vector<1x512xf32>
      %c0_42 = arith.constant 0 : index
      %c0_43 = arith.constant 0 : index
      %70 = vector.load %arg7[%c0_42, %c0_43] : memref<1x512xf32, #tpu.memory_space<vmem>>, vector<1x512xf32>
      %71 = arith.mulf %57, %69 : vector<1x512xf32>
      %72 = arith.subf %70, %71 : vector<1x512xf32>
      %73 = vector.broadcast %69 : vector<1x512xf32> to vector<8x512xf32>
      %74 = arith.mulf %53, %73 : vector<8x512xf32>
      %75 = vector.broadcast %72 : vector<1x512xf32> to vector<8x512xf32>
      %76 = arith.addf %74, %75 : vector<8x512xf32>
      %cst_44 = arith.constant 0.000000e+00 : f32
      %77 = vector.broadcast %cst_44 : f32 to vector<8x512xf32>
      %78 = arith.maximumf %76, %77 : vector<8x512xf32>
      %79 = arith.truncf %78 : vector<8x512xf32> to vector<8x512xbf16>
      %c0_45 = arith.constant 0 : index
      %c0_46 = arith.constant 0 : index
      %80 = vector.load %arg8[%c0_45, %c0_46] : memref<512x128xbf16, #tpu.memory_space<vmem>>, vector<512x128xbf16>
      %cst_47 = arith.constant dense<0.000000e+00> : vector<8x128xf32>
      %81 = tpu.matmul %79, %80, %cst_47 {dimension_numbers = #tpu.dot_dimension_numbers<[1], [0], [0], [1], [0, 0, 1, 1], [], []>} : vector<8x512xbf16>, vector<512x128xbf16>, vector<8x128xf32> -> vector<8x128xf32>
      %c0_48 = arith.constant 0 : index
      %c0_49 = arith.constant 0 : index
      %82 = vector.load %arg9[%c0_48, %c0_49] : memref<1x128xf32, #tpu.memory_space<vmem>>, vector<1x128xf32>
      %83 = vector.broadcast %82 : vector<1x128xf32> to vector<8x128xf32>
      %84 = arith.addf %81, %83 : vector<8x128xf32>
      %c0_50 = arith.constant 0 : index
      %c0_51 = arith.constant 0 : index
      %85 = vector.load %arg10[%c0_50, %c0_51] : memref<8x128xf32, #tpu.memory_space<vmem>>, vector<8x128xf32>
      tpu.vector_store %arg10[%c0_50, %c0_51], %84 {strides = array<i32>} : memref<8x128xf32, #tpu.memory_space<vmem>>, vector<8x128xf32>,
      %86 = tpu.iota {dimensions = array<i32: 1>} : vector<8x128xi32>
      %c4_i32 = arith.constant 4 : i32
      %87 = vector.broadcast %c4_i32 : i32 to vector<8x128xi32>
      %88 = arith.cmpi slt, %86, %87 : vector<8x128xi32>
      %cst_52 = arith.constant -1.000000e+30 : f32
      %89 = vector.broadcast %cst_52 : f32 to vector<8x128xf32>
      %90 = arith.select %88, %84, %89 : vector<8x128xi1>, vector<8x128xf32>
      %cst_53 = arith.constant dense<0xFF800000> : vector<8xf32>
      %91 = vector.multi_reduction <maximumf>, %90, %cst_53 [1] : vector<8x128xf32> to vector<8xf32>
      %92 = vector.shape_cast %91 : vector<8xf32> to vector<8x1xf32>
      %93 = vector.broadcast %92 : vector<8x1xf32> to vector<8x128xf32>
      %94 = arith.subf %90, %93 : vector<8x128xf32>
      %95 = math.exp %94 : vector<8x128xf32>
      %cst_54 = arith.constant 0.000000e+00 : f32
      %96 = vector.broadcast %cst_54 : f32 to vector<8x128xf32>
      %97 = arith.select %88, %95, %96 : vector<8x128xi1>, vector<8x128xf32>
      %cst_55 = arith.constant dense<0.000000e+00> : vector<8xf32>
      %98 = vector.multi_reduction <add>, %97, %cst_55 [1] : vector<8x128xf32> to vector<8xf32>
      %99 = vector.shape_cast %98 : vector<8xf32> to vector<8x1xf32>
      %100 = vector.broadcast %99 : vector<8x1xf32> to vector<8x128xf32>
      %101 = arith.divf %97, %100 : vector<8x128xf32>
      %c0_56 = arith.constant 0 : index
      %c0_57 = arith.constant 0 : index
      %102 = vector.load %arg11[%c0_56, %c0_57] : memref<8x128xf32, #tpu.memory_space<vmem>>, vector<8x128xf32>
      tpu.vector_store %arg11[%c0_56, %c0_57], %101 {strides = array<i32>} : memref<8x128xf32, #tpu.memory_space<vmem>>, vector<8x128xf32>,
    } else {
    }
    return
  }
  func.func @transform_0(%arg0: i32) -> (i32, i32, i32) {
    %c0_i32 = arith.constant 0 : i32
    %c0_i32_0 = arith.constant 0 : i32
    %c0_i32_1 = arith.constant 0 : i32
    return %c0_i32, %c0_i32_0, %arg0 : i32, i32, i32
  }
  func.func @transform_1(%arg0: i32) -> (i32, i32) {
    %c0_i32 = arith.constant 0 : i32
    %c0_i32_0 = arith.constant 0 : i32
    %c0_i32_1 = arith.constant 0 : i32
    return %c0_i32, %c0_i32_0 : i32, i32
  }
  func.func @transform_2(%arg0: i32) -> (i32, i32) {
    %c0_i32 = arith.constant 0 : i32
    %c0_i32_0 = arith.constant 0 : i32
    %c0_i32_1 = arith.constant 0 : i32
    return %c0_i32, %c0_i32_0 : i32, i32
  }
  func.func @transform_3(%arg0: i32) -> (i32, i32) {
    %c0_i32 = arith.constant 0 : i32
    %c0_i32_0 = arith.constant 0 : i32
    %c0_i32_1 = arith.constant 0 : i32
    return %c0_i32, %c0_i32_0 : i32, i32
  }
  func.func @transform_4(%arg0: i32) -> (i32, i32) {
    %c0_i32 = arith.constant 0 : i32
    %c0_i32_0 = arith.constant 0 : i32
    %c0_i32_1 = arith.constant 0 : i32
    return %c0_i32, %c0_i32_0 : i32, i32
  }
  func.func @transform_5(%arg0: i32) -> (i32, i32) {
    %c0_i32 = arith.constant 0 : i32
    %c0_i32_0 = arith.constant 0 : i32
    %c0_i32_1 = arith.constant 0 : i32
    return %c0_i32, %c0_i32_0 : i32, i32
  }
  func.func @transform_6(%arg0: i32) -> (i32, i32) {
    %c0_i32 = arith.constant 0 : i32
    %c0_i32_0 = arith.constant 0 : i32
    %c0_i32_1 = arith.constant 0 : i32
    return %c0_i32, %c0_i32_0 : i32, i32
  }
  func.func @transform_7(%arg0: i32) -> (i32, i32) {
    %c0_i32 = arith.constant 0 : i32
    %c0_i32_0 = arith.constant 0 : i32
    %c0_i32_1 = arith.constant 0 : i32
    return %c0_i32, %c0_i32_0 : i32, i32
  }
  func.func @transform_8(%arg0: i32) -> (i32, i32) {
    %c0_i32 = arith.constant 0 : i32
    %c0_i32_0 = arith.constant 0 : i32
    %c0_i32_1 = arith.constant 0 : i32
    return %c0_i32, %c0_i32_0 : i32, i32
  }
  func.func @transform_9(%arg0: i32) -> (i32, i32) {
    %c0_i32 = arith.constant 0 : i32
    %c0_i32_0 = arith.constant 0 : i32
    %c0_i32_1 = arith.constant 0 : i32
    return %c0_i32, %c0_i32_0 : i32, i32
  }
  func.func @transform_10(%arg0: i32) -> (i32, i32) {
    %c0_i32 = arith.constant 0 : i32
    %c0_i32_0 = arith.constant 0 : i32
    %c0_i32_1 = arith.constant 0 : i32
    return %c0_i32, %c0_i32_0 : i32, i32
  }
}

</mosaic_0001>

<llo_original>
// kernel: head_forward.1
$region0: #{head_forward.1}
  #allocation0 [shape = 'u32[]', space=smem, size = 0x4, offset = 0x4, fixed_abs, tag = 'smem constant byte address 0x4 - core index']
  #allocation1 [shape = 'u32[144,128]{1,0:T(1,128)}', space=vmem, size = 0x12000, scoped, tag = 'internal scratch']
  #allocation2 [shape = 'f32[8,512]{1,0:T(8,128)}', space=vmem, size = 0x4000, scoped, tag = 'scratch operand']
  %s0 = inlined_call_operand.vmem [shape: f32[8,3,256], index: 0, kind: input, shape index: {}]
  %s1 = inlined_call_operand.vmem [shape: f32[3,512], index: 1, kind: input, shape index: {}]
  %s2 = inlined_call_operand.vmem [shape: f32[1,512], index: 2, kind: input, shape index: {}]
  %s3 = inlined_call_operand.hbm [shape: bf16[512,512], index: 3, kind: input, shape index: {}]
  %s4 = inlined_call_operand.vmem [shape: f32[1,512], index: 4, kind: input, shape index: {}]
  %s5 = inlined_call_operand.vmem [shape: f32[1,512], index: 5, kind: input, shape index: {}]
  %s6 = inlined_call_operand.vmem [shape: f32[1,512], index: 6, kind: input, shape index: {}]
  %s7 = inlined_call_operand.hbm [shape: bf16[512,128], index: 7, kind: input, shape index: {}]
  %s8 = inlined_call_operand.vmem [shape: f32[1,128], index: 8, kind: input, shape index: {}]
  %s9 = inlined_call_operand.vmem [shape: f32[8,128], index: 9, kind: output, shape index: {0}]
  %s10 = inlined_call_operand.vmem [shape: f32[8,128], index: 10, kind: output, shape index: {1}]
  %11 = xla_tuple %s9, %s10
  %s12 = sld [smem:[#allocation0]]
  $region134: #{head_forward.1} parent=0
    _
  %s14 = ssub.s32 1, %s12
  %s15 = scalar_select 0, %s14, %s12
  $region1: #{head_forward.1} parent=0
    #allocation3 [shape = 'u8[32768]{0}', space=vmem, size = 0x8000, scoped, tag = 'input window, operand 0']
    #allocation4 [shape = 'u8[524288]{0}', space=vmem, size = 0x80000, scoped, tag = 'input window, operand 3, single buffered']
    #allocation5 [shape = 's32[2]{0}', space=sflag, size = 0x8, scoped, tag = 'scoped memory for head_forward.1']
    #allocation6 [shape = 'u8[131072]{0}', space=vmem, size = 0x20000, scoped, tag = 'input window, operand 7, single buffered']
    #allocation7 [shape = 's32[1]{0}', space=sflag, size = 0x4, scoped, tag = 'scoped memory for head_forward.1']
    %16 = vsyncpa [#allocation5], 0
    %17 = vsyncpa [#allocation7], 0
    loop: start=0, step=1, limit=4
    $region2: #{head_forward.1} parent=1 // loop_pre_header
      _
    $region3: #{head_forward.1} parent=1 // loop_header
      %s19 = sphi 0, %s23
      %p20 = scmp.ge.s32.totalorder %s19, 4
      %s29 = sphi 0, %s31
      %s32 = sphi 0, %s29
      %s33 = sphi 0, %s32
      %s49 = sphi 0, %s33
      %s53 = sphi 0, %s53
      %s55 = sphi 0, %s53
      %s56 = sphi 0, %s55
      %s70 = sphi 0, %s56
      %s74 = sphi 0, %s74
      %s76 = sphi 0, %s74
      %s77 = sphi 0, %s76
      %s91 = sphi 0, %s77
      %s95 = sphi 0, %s95
      %s97 = sphi 0, %s95
      %s98 = sphi 0, %s97
      %s112 = sphi 0, %s98
      %s116 = sphi 0, %s116
      %s118 = sphi 0, %s116
      %s119 = sphi 0, %s118
      %s133 = sphi 0, %s119
      %s137 = sphi 0, %s137
      %s139 = sphi 0, %s137
      %s140 = sphi 0, %s139
      %s154 = sphi 0, %s140
      %s158 = sphi 0, %s158
      %s160 = sphi 0, %s158
      %s161 = sphi 0, %s160
      %s175 = sphi 0, %s161
      %s179 = sphi 0, %s179
      %s181 = sphi 0, %s179
      %s182 = sphi 0, %s181
      %s196 = sphi 0, %s182
      %s200 = sphi 0, %s200
      %s202 = sphi 0, %s200
      %s203 = sphi 0, %s202
      %s217 = sphi 0, %s203
      %s221 = sphi 0, %s221
      %s223 = sphi 0, %s221
      %s224 = sphi 0, %s223
      %s238 = sphi 0, %s224
      %s242 = sphi 0, %s242
      %s244 = sphi 0, %s242
      %s245 = sphi 0, %s244
      %s259 = sphi 0, %s245
    $region4: #{head_forward.1} parent=1 // loop_header_branch
      %22 = sbr.rel (%p20) target = $region8
    $region5: #{head_forward.1} parent=1 // loop_body
      %s24 = ssub.s32 %s19, 1
      %s25 = ssub.s32 %s19, 2
      %s26 = sadd.s32 %s19, 1
      %s27 = ssub.s32 %s19, %s26
      %p28 = scmp.eq.s32.totalorder %s27, 0
      %s30 = sadd.s32 %s29, 1
      %s31 = scalar_select %p28, %s29, %s30
      %p34 = pneg %p28
      %p35 = scmp.eq.s32.totalorder %s19, 1
      %p36 = por %p34, %p35
      %p37 = scmp.ne.s32.totalorder %s29, %s32
      %p38 = scmp.eq.s32.totalorder %s19, 0
      %p39 = por %p37, %p38
      %p40 = scmp.ne.s32.totalorder %s29, %s32
      %p41 = scmp.eq.s32.totalorder %s24, 1
      %p42 = por %p40, %p41
      %p43 = scmp.ne.s32.totalorder %s32, %s33
      %p44 = scmp.eq.s32.totalorder %s24, 0
      %p45 = por %p43, %p44
      %p46 = scmp.ne.s32.totalorder %s32, %s33
      %p47 = scmp.eq.s32.totalorder %s25, 1
      %p48 = por %p46, %p47
      %p50 = scmp.ne.s32.totalorder %s33, %s49
      %p51 = scmp.eq.s32.totalorder %s25, 0
      %p52 = por %p50, %p51
      %s54 = sadd.s32 %s53, 1
      %p57 = scmp.eq.s32.totalorder %s19, 1
      %p58 = scmp.ne.s32.totalorder %s53, %s55
      %p59 = scmp.eq.s32.totalorder %s19, 0
      %p60 = por %p58, %p59
      %p61 = scmp.ne.s32.totalorder %s53, %s55
      %p62 = scmp.eq.s32.totalorder %s24, 1
      %p63 = por %p61, %p62
      %p64 = scmp.ne.s32.totalorder %s55, %s56
      %p65 = scmp.eq.s32.totalorder %s24, 0
      %p66 = por %p64, %p65
      %p67 = scmp.ne.s32.totalorder %s55, %s56
      %p68 = scmp.eq.s32.totalorder %s25, 1
      %p69 = por %p67, %p68
      %p71 = scmp.ne.s32.totalorder %s56, %s70
      %p72 = scmp.eq.s32.totalorder %s25, 0
      %p73 = por %p71, %p72
      %s75 = sadd.s32 %s74, 1
      %p78 = scmp.eq.s32.totalorder %s19, 1
      %p79 = scmp.ne.s32.totalorder %s74, %s76
      %p80 = scmp.eq.s32.totalorder %s19, 0
      %p81 = por %p79, %p80
      %p82 = scmp.ne.s32.totalorder %s74, %s76
      %p83 = scmp.eq.s32.totalorder %s24, 1
      %p84 = por %p82, %p83
      %p85 = scmp.ne.s32.totalorder %s76, %s77
      %p86 = scmp.eq.s32.totalorder %s24, 0
      %p87 = por %p85, %p86
      %p88 = scmp.ne.s32.totalorder %s76, %s77
      %p89 = scmp.eq.s32.totalorder %s25, 1
      %p90 = por %p88, %p89
      %p92 = scmp.ne.s32.totalorder %s77, %s91
      %p93 = scmp.eq.s32.totalorder %s25, 0
      %p94 = por %p92, %p93
      %s96 = sadd.s32 %s95, 1
      %p99 = scmp.eq.s32.totalorder %s19, 1
      %p100 = scmp.ne.s32.totalorder %s95, %s97
      %p101 = scmp.eq.s32.totalorder %s19, 0
      %p102 = por %p100, %p101
      %p103 = scmp.ne.s32.totalorder %s95, %s97
      %p104 = scmp.eq.s32.totalorder %s24, 1
      %p105 = por %p103, %p104
      %p106 = scmp.ne.s32.totalorder %s97, %s98
      %p107 = scmp.eq.s32.totalorder %s24, 0
      %p108 = por %p106, %p107
      %p109 = scmp.ne.s32.totalorder %s97, %s98
      %p110 = scmp.eq.s32.totalorder %s25, 1
      %p111 = por %p109, %p110
      %p113 = scmp.ne.s32.totalorder %s98, %s112
      %p114 = scmp.eq.s32.totalorder %s25, 0
      %p115 = por %p113, %p114
      %s117 = sadd.s32 %s116, 1
      %p120 = scmp.eq.s32.totalorder %s19, 1
      %p121 = scmp.ne.s32.totalorder %s116, %s118
      %p122 = scmp.eq.s32.totalorder %s19, 0
      %p123 = por %p121, %p122
      %p124 = scmp.ne.s32.totalorder %s116, %s118
      %p125 = scmp.eq.s32.totalorder %s24, 1
      %p126 = por %p124, %p125
      %p127 = scmp.ne.s32.totalorder %s118, %s119
      %p128 = scmp.eq.s32.totalorder %s24, 0
      %p129 = por %p127, %p128
      %p130 = scmp.ne.s32.totalorder %s118, %s119
      %p131 = scmp.eq.s32.totalorder %s25, 1
      %p132 = por %p130, %p131
      %p134 = scmp.ne.s32.totalorder %s119, %s133
      %p135 = scmp.eq.s32.totalorder %s25, 0
      %p136 = por %p134, %p135
      %s138 = sadd.s32 %s137, 1
      %p141 = scmp.eq.s32.totalorder %s19, 1
      %p142 = scmp.ne.s32.totalorder %s137, %s139
      %p143 = scmp.eq.s32.totalorder %s19, 0
      %p144 = por %p142, %p143
      %p145 = scmp.ne.s32.totalorder %s137, %s139
      %p146 = scmp.eq.s32.totalorder %s24, 1
      %p147 = por %p145, %p146
      %p148 = scmp.ne.s32.totalorder %s139, %s140
      %p149 = scmp.eq.s32.totalorder %s24, 0
      %p150 = por %p148, %p149
      %p151 = scmp.ne.s32.totalorder %s139, %s140
      %p152 = scmp.eq.s32.totalorder %s25, 1
      %p153 = por %p151, %p152
      %p155 = scmp.ne.s32.totalorder %s140, %s154
      %p156 = scmp.eq.s32.totalorder %s25, 0
      %p157 = por %p155, %p156
      %s159 = sadd.s32 %s158, 1
      %p162 = scmp.eq.s32.totalorder %s19, 1
      %p163 = scmp.ne.s32.totalorder %s158, %s160
      %p164 = scmp.eq.s32.totalorder %s19, 0
      %p165 = por %p163, %p164
      %p166 = scmp.ne.s32.totalorder %s158, %s160
      %p167 = scmp.eq.s32.totalorder %s24, 1
      %p168 = por %p166, %p167
      %p169 = scmp.ne.s32.totalorder %s160, %s161
      %p170 = scmp.eq.s32.totalorder %s24, 0
      %p171 = por %p169, %p170
      %p172 = scmp.ne.s32.totalorder %s160, %s161
      %p173 = scmp.eq.s32.totalorder %s25, 1
      %p174 = por %p172, %p173
      %p176 = scmp.ne.s32.totalorder %s161, %s175
      %p177 = scmp.eq.s32.totalorder %s25, 0
      %p178 = por %p176, %p177
      %s180 = sadd.s32 %s179, 1
      %p183 = scmp.eq.s32.totalorder %s19, 1
      %p184 = scmp.ne.s32.totalorder %s179, %s181
      %p185 = scmp.eq.s32.totalorder %s19, 0
      %p186 = por %p184, %p185
      %p187 = scmp.ne.s32.totalorder %s179, %s181
      %p188 = scmp.eq.s32.totalorder %s24, 1
      %p189 = por %p187, %p188
      %p190 = scmp.ne.s32.totalorder %s181, %s182
      %p191 = scmp.eq.s32.totalorder %s24, 0
      %p192 = por %p190, %p191
      %p193 = scmp.ne.s32.totalorder %s181, %s182
      %p194 = scmp.eq.s32.totalorder %s25, 1
      %p195 = por %p193, %p194
      %p197 = scmp.ne.s32.totalorder %s182, %s196
      %p198 = scmp.eq.s32.totalorder %s25, 0
      %p199 = por %p197, %p198
      %s201 = sadd.s32 %s200, 1
      %p204 = scmp.eq.s32.totalorder %s19, 1
      %p205 = scmp.ne.s32.totalorder %s200, %s202
      %p206 = scmp.eq.s32.totalorder %s19, 0
      %p207 = por %p205, %p206
      %p208 = scmp.ne.s32.totalorder %s200, %s202
      %p209 = scmp.eq.s32.totalorder %s24, 1
      %p210 = por %p208, %p209
      %p211 = scmp.ne.s32.totalorder %s202, %s203
      %p212 = scmp.eq.s32.totalorder %s24, 0
      %p213 = por %p211, %p212
      %p214 = scmp.ne.s32.totalorder %s202, %s203
      %p215 = scmp.eq.s32.totalorder %s25, 1
      %p216 = por %p214, %p215
      %p218 = scmp.ne.s32.totalorder %s203, %s217
      %p219 = scmp.eq.s32.totalorder %s25, 0
      %p220 = por %p218, %p219
      %s222 = sadd.s32 %s221, 1
      %p225 = scmp.eq.s32.totalorder %s19, 1
      %p226 = scmp.ne.s32.totalorder %s221, %s223
      %p227 = scmp.eq.s32.totalorder %s19, 0
      %p228 = por %p226, %p227
      %p229 = scmp.ne.s32.totalorder %s221, %s223
      %p230 = scmp.eq.s32.totalorder %s24, 1
      %p231 = por %p229, %p230
      %p232 = scmp.ne.s32.totalorder %s223, %s224
      %p233 = scmp.eq.s32.totalorder %s24, 0
      %p234 = por %p232, %p233
      %p235 = scmp.ne.s32.totalorder %s223, %s224
      %p236 = scmp.eq.s32.totalorder %s25, 1
      %p237 = por %p235, %p236
      %p239 = scmp.ne.s32.totalorder %s224, %s238
      %p240 = scmp.eq.s32.totalorder %s25, 0
      %p241 = por %p239, %p240
      %s243 = sadd.s32 %s242, 1
      %p246 = scmp.eq.s32.totalorder %s19, 1
      %p247 = scmp.ne.s32.totalorder %s242, %s244
      %p248 = scmp.eq.s32.totalorder %s19, 0
      %p249 = por %p247, %p248
      %p250 = scmp.ne.s32.totalorder %s242, %s244
      %p251 = scmp.eq.s32.totalorder %s24, 1
      %p252 = por %p250, %p251
      %p253 = scmp.ne.s32.totalorder %s244, %s245
      %p254 = scmp.eq.s32.totalorder %s24, 0
      %p255 = por %p253, %p254
      %p256 = scmp.ne.s32.totalorder %s244, %s245
      %p257 = scmp.eq.s32.totalorder %s25, 1
      %p258 = por %p256, %p257
      %p260 = scmp.ne.s32.totalorder %s245, %s259
      %p261 = scmp.eq.s32.totalorder %s25, 0
      %p262 = por %p260, %p261
      %p263 = scmp.le.s32.totalorder 1, %s19
      %p264 = scmp.lt.s32.totalorder %s19, 3
      %p265 = pnand %p263, %p264
      %p266 = pneg %p265
      // Predicated region
      $region9: #{head_forward.1} parent=5 // pred_check
        _
      $region10: #{head_forward.1} parent=5 // pred_check_branch
        %268 = sbr.rel (%p265) target = $region12
      $region11: #{head_forward.1} parent=5 // pred_region
        %s269 = ssub.s32 %s19, 1
        // Predicated region
        $region13: #{head_forward.1} parent=11 // pred_check
          %p270 = pneg %p66
        $region14: #{head_forward.1} parent=11 // pred_check_branch
          %272 = sbr.rel (%p270) target = $region16
        $region15: #{head_forward.1} parent=11 // pred_region
          _
        $region16: #{head_forward.1} parent=11 // pred_fallthru
          _
        // Predicated region
        $region17: #{head_forward.1} parent=11 // pred_check
          %p273 = pneg %p87
        $region18: #{head_forward.1} parent=11 // pred_check_branch
          %275 = sbr.rel (%p273) target = $region20
        $region19: #{head_forward.1} parent=11 // pred_region
          _
        $region20: #{head_forward.1} parent=11 // pred_fallthru
          _
        // Predicated region
        $region21: #{head_forward.1} parent=11 // pred_check
          %p276 = pneg %p108
        $region22: #{head_forward.1} parent=11 // pred_check_branch
          %278 = sbr.rel (%p276) target = $region24
        $region23: #{head_forward.1} parent=11 // pred_region
          %s280 = ssub.s32 16384, 16384
          %281 = vsyncadd [#allocation5], %s280
          %s282 = sshll.u32 [#allocation4], 4
          %s283 = int_to_ptr.vmem [resolvable:$true] %s282
          %288 = dma.hbm_to_vmem [thread:$0]  %s3, 16384, %s283, [#allocation5], 256, 256, 16
        $region24: #{head_forward.1} parent=11 // pred_fallthru
          _
        // Predicated region
        $region25: #{head_forward.1} parent=11 // pred_check
          %p289 = pneg %p129
        $region26: #{head_forward.1} parent=11 // pred_check_branch
          %291 = sbr.rel (%p289) target = $region28
        $region27: #{head_forward.1} parent=11 // pred_region
          _
        $region28: #{head_forward.1} parent=11 // pred_fallthru
          _
        // Predicated region
        $region29: #{head_forward.1} parent=11 // pred_check
          %p292 = pneg %p150
        $region30: #{head_forward.1} parent=11 // pred_check_branch
          %294 = sbr.rel (%p292) target = $region32
        $region31: #{head_forward.1} parent=11 // pred_region
          _
        $region32: #{head_forward.1} parent=11 // pred_fallthru
          _
        // Predicated region
        $region33: #{head_forward.1} parent=11 // pred_check
          %p295 = pneg %p171
        $region34: #{head_forward.1} parent=11 // pred_check_branch
          %297 = sbr.rel (%p295) target = $region36
        $region35: #{head_forward.1} parent=11 // pred_region
          _
        $region36: #{head_forward.1} parent=11 // pred_fallthru
          _
        // Predicated region
        $region37: #{head_forward.1} parent=11 // pred_check
          %p298 = pneg %p192
        $region38: #{head_forward.1} parent=11 // pred_check_branch
          %300 = sbr.rel (%p298) target = $region40
        $region39: #{head_forward.1} parent=11 // pred_region
          %s302 = ssub.s32 4096, 4096
          %303 = vsyncadd [#allocation7], %s302
          %s304 = sshll.u32 [#allocation6], 4
          %s305 = int_to_ptr.vmem [resolvable:$true] %s304
          %310 = dma.hbm_to_vmem [thread:$0]  %s7, 4096, %s305, [#allocation7], 64, 64, 4
        $region40: #{head_forward.1} parent=11 // pred_fallthru
          _
        // Predicated region
        $region41: #{head_forward.1} parent=11 // pred_check
          %p311 = pneg %p213
        $region42: #{head_forward.1} parent=11 // pred_check_branch
          %313 = sbr.rel (%p311) target = $region44
        $region43: #{head_forward.1} parent=11 // pred_region
          _
        $region44: #{head_forward.1} parent=11 // pred_fallthru
          _
      $region12: #{head_forward.1} parent=5 // pred_fallthru
        _
      %p314 = scmp.lt.s32.totalorder %s19, 2
      // Predicated region
      $region45: #{head_forward.1} parent=5 // pred_check
        %p315 = pneg %p314
      $region46: #{head_forward.1} parent=5 // pred_check_branch
        %317 = sbr.rel (%p315) target = $region48
      $region47: #{head_forward.1} parent=5 // pred_region
        // Predicated region
        $region49: #{head_forward.1} parent=47 // pred_check
          %p318 = pneg %p39
        $region50: #{head_forward.1} parent=47 // pred_check_branch
          %320 = sbr.rel (%p318) target = $region52
        $region51: #{head_forward.1} parent=47 // pred_region
          %s321 = sand.u32 %s29, 1
          %s322 = sand.u32 %s29, 1
          %s323 = smul.addr %s322, 32
          %s324 = scalar_lea.vmem [#allocation3], %s323
          %s325 = smul.addr %s19, 4
          %s326 = scalar_lea.vmem %s0, %s325
          // Predicated region
          $region53: #{head_forward.1} parent=51 // pred_check
            _
          $region54: #{head_forward.1} parent=51 // pred_check_branch
            %328 = sbr.rel (0) target = $region56
          $region55: #{head_forward.1} parent=51 // pred_region
            // Predicated region
            $region57: #{head_forward.1} parent=55 // pred_check
              _
            $region58: #{head_forward.1} parent=55 // pred_check_branch
              %330 = sbr.rel target = $region60
            $region59: #{head_forward.1} parent=55 // pred_region
              // Predicated region
              $region72: #{head_forward.1} parent=59 // pred_check
                _
              $region73: #{head_forward.1} parent=59 // pred_check_branch
                %359 = sbr.rel (0) target = $region75
              $region74: #{head_forward.1} parent=59 // pred_region
                loop: start=0, step=1, limit=1
                $region76: #{head_forward.1} parent=74 // loop_pre_header
                  _
                $region77: #{head_forward.1} parent=74 // loop_header
                  %s361 = sphi 0, %s365
                  %p362 = scmp.ge.s32.totalorder %s361, 1
                  %s366 = sphi %s326, %s326
                  %s367 = sphi %s324, %s324
                $region78: #{head_forward.1} parent=74 // loop_header_branch
                  %364 = sbr.rel (%p362) target = $region82
                $region79: #{head_forward.1} parent=74 // loop_body
                  _
                $region80: #{head_forward.1} parent=74 // loop_footer
                  %s365 = sadd.s32 1, %s361
                $region81: #{head_forward.1} parent=74 // loop_footer_branch
                  %360 = sbr.rel target = $region77
                $region82: #{head_forward.1} parent=74 // loop_exit
                  _
                loop: start=0, step=1, limit=1
                $region83: #{head_forward.1} parent=74 // loop_pre_header
                  _
                $region84: #{head_forward.1} parent=74 // loop_header
                  %s370 = sphi 0, %s374
                  %p371 = scmp.ge.s32.totalorder %s370, 1
                  %s375 = sphi %s326, %s326
                  %s376 = sphi %s324, %s324
                $region85: #{head_forward.1} parent=74 // loop_header_branch
                  %373 = sbr.rel (%p371) target = $region89
                $region86: #{head_forward.1} parent=74 // loop_body
                  %v377 = vld [vmem:[%s375] sm:$0xf]
                  %378 = vst [vmem:[%s376] sm:$0xf] %v377
                  %v379 = vld [vmem:[%s375 + $0x8] sm:$0xf]
                  %380 = vst [vmem:[%s376 + $0x4] sm:$0xf] %v379
                  %v381 = vld [vmem:[%s375 + $0x10] sm:$0xf]
                  %382 = vst [vmem:[%s376 + $0x8] sm:$0xf] %v381
                  %v383 = vld [vmem:[%s375 + $0x18] sm:$0xf]
                  %384 = vst [vmem:[%s376 + $0xc] sm:$0xf] %v383
                  %v385 = vld [vmem:[%s375 + $0x20] sm:$0xf]
                  %386 = vst [vmem:[%s376 + $0x10] sm:$0xf] %v385
                  %v387 = vld [vmem:[%s375 + $0x28] sm:$0xf]
                  %388 = vst [vmem:[%s376 + $0x14] sm:$0xf] %v387
                  %v389 = vld [vmem:[%s375 + $0x30] sm:$0xf]
                  %390 = vst [vmem:[%s376 + $0x18] sm:$0xf] %v389
                  %v391 = vld [vmem:[%s375 + $0x38] sm:$0xf]
                  %392 = vst [vmem:[%s376 + $0x1c] sm:$0xf] %v391
                $region87: #{head_forward.1} parent=74 // loop_footer
                  %s374 = sadd.s32 1, %s370
                $region88: #{head_forward.1} parent=74 // loop_footer_branch
                  %369 = sbr.rel target = $region84
                $region89: #{head_forward.1} parent=74 // loop_exit
                  _
              $region75: #{head_forward.1} parent=59 // pred_fallthru
                _
            $region60: #{head_forward.1} parent=55 // pred_fallthru
              _
            // Predicated region
            $region61: #{head_forward.1} parent=55 // pred_check
              _
            $region62: #{head_forward.1} parent=55 // pred_check_branch
              %332 = sbr.rel (0) target = $region64
            $region63: #{head_forward.1} parent=55 // pred_region
              loop: start=0, step=1, limit=1
              $region65: #{head_forward.1} parent=63 // loop_pre_header
                _
              $region66: #{head_forward.1} parent=63 // loop_header
                %s335 = sphi 0, %s339
                %p336 = scmp.ge.s32.totalorder %s335, 1
                %s340 = sphi %s326, %s326
                %s341 = sphi %s324, %s324
              $region67: #{head_forward.1} parent=63 // loop_header_branch
                %338 = sbr.rel (%p336) target = $region71
              $region68: #{head_forward.1} parent=63 // loop_body
                %v342 = vld [vmem:[%s340] sm:$0xf]
                %343 = vst [vmem:[%s341] sm:$0xf] %v342
                %v344 = vld [vmem:[%s340 + $0x8] sm:$0xf]
                %345 = vst [vmem:[%s341 + $0x4] sm:$0xf] %v344
                %v346 = vld [vmem:[%s340 + $0x10] sm:$0xf]
                %347 = vst [vmem:[%s341 + $0x8] sm:$0xf] %v346
                %v348 = vld [vmem:[%s340 + $0x18] sm:$0xf]
                %349 = vst [vmem:[%s341 + $0xc] sm:$0xf] %v348
                %v350 = vld [vmem:[%s340 + $0x20] sm:$0xf]
                %351 = vst [vmem:[%s341 + $0x10] sm:$0xf] %v350
                %v352 = vld [vmem:[%s340 + $0x28] sm:$0xf]
                %353 = vst [vmem:[%s341 + $0x14] sm:$0xf] %v352
                %v354 = vld [vmem:[%s340 + $0x30] sm:$0xf]
                %355 = vst [vmem:[%s341 + $0x18] sm:$0xf] %v354
                %v356 = vld [vmem:[%s340 + $0x38] sm:$0xf]
                %357 = vst [vmem:[%s341 + $0x1c] sm:$0xf] %v356
              $region69: #{head_forward.1} parent=63 // loop_footer
                %s339 = sadd.s32 1, %s335
              $region70: #{head_forward.1} parent=63 // loop_footer_branch
                %334 = sbr.rel target = $region66
              $region71: #{head_forward.1} parent=63 // loop_exit
                _
            $region64: #{head_forward.1} parent=55 // pred_fallthru
              _
          $region56: #{head_forward.1} parent=51 // pred_fallthru
            _
          %393 = vnop
        $region52: #{head_forward.1} parent=47 // pred_fallthru
          _
      $region48: #{head_forward.1} parent=5 // pred_fallthru
        _
      %p394 = scmp.le.s32.totalorder 1, %s19
      %p395 = scmp.lt.s32.totalorder %s19, 3
      %p396 = pnand %p394, %p395
      %p397 = pneg %p396
      // Predicated region
      $region90: #{head_forward.1} parent=5 // pred_check
        _
      $region91: #{head_forward.1} parent=5 // pred_check_branch
        %399 = sbr.rel (%p396) target = $region93
      $region92: #{head_forward.1} parent=5 // pred_region
        %s400 = ssub.s32 %s19, 1
        %s401 = sand.u32 %s32, 1
        %s402 = sand.u32 %s32, 1
        %s403 = smul.addr %s402, 32
        %s404 = scalar_lea.vmem [#allocation3], %s403
        // Predicated region
        $region94: #{head_forward.1} parent=92 // pred_check
          %p405 = pneg %p45
        $region95: #{head_forward.1} parent=92 // pred_check_branch
          %407 = sbr.rel (%p405) target = $region97
        $region96: #{head_forward.1} parent=92 // pred_region
          _
        $region97: #{head_forward.1} parent=92 // pred_fallthru
          _
        // Predicated region
        $region98: #{head_forward.1} parent=92 // pred_check
          %p408 = pneg %p108
        $region99: #{head_forward.1} parent=92 // pred_check_branch
          %410 = sbr.rel (%p408) target = $region101
        $region100: #{head_forward.1} parent=92 // pred_region
          %411 = dma.done [#allocation5], 16384
        $region101: #{head_forward.1} parent=92 // pred_fallthru
          _
        // Predicated region
        $region102: #{head_forward.1} parent=92 // pred_check
          %p412 = pneg %p192
        $region103: #{head_forward.1} parent=92 // pred_check_branch
          %414 = sbr.rel (%p412) target = $region105
        $region104: #{head_forward.1} parent=92 // pred_region
          %415 = dma.done [#allocation7], 4096
        $region105: #{head_forward.1} parent=92 // pred_fallthru
          _
        %s416 = sand.u32 %s32, 1
        %s417 = sand.u32 %s32, 1
        %s418 = smul.addr %s417, 32
        %s419 = scalar_lea.vmem [#allocation3], %s418
        %p420 = pneg %p45
        %p421 = pneg %p42
        %p422 = pneg %p66
        %p423 = pneg %p63
        %p424 = pneg %p87
        %p425 = pneg %p84
        %p426 = pneg %p108
        %p427 = pneg %p105
        %p428 = pneg %p129
        %p429 = pneg %p126
        %p430 = pneg %p150
        %p431 = pneg %p147
        %p432 = pneg %p171
        %p433 = pneg %p168
        %p434 = pneg %p192
        %p435 = pneg %p189
        %p436 = pneg %p213
        %p437 = pneg %p210
        %p438 = pneg %p234
        %p439 = pneg %p231
        %p440 = pneg %p255
        %p441 = pneg %p252
        %p443 = scmp.eq.s32.totalorder %s24, 0
        // Predicated region
        $region106: #{head_forward.1} parent=92 // pred_check
          %p444 = pneg %p443
        $region107: #{head_forward.1} parent=92 // pred_check_branch
          %446 = sbr.rel (%p444) target = $region109
        $region108: #{head_forward.1} parent=92 // pred_region
          %447 = vst [vmem:[#allocation2] sm:$0xff] 0.0
          %448 = vst [vmem:[#allocation2 + $0x8] sm:$0xff] 0.0
          %449 = vst [vmem:[#allocation2 + $0x10] sm:$0xff] 0.0
          %450 = vst [vmem:[#allocation2 + $0x18] sm:$0xff] 0.0
        $region109: #{head_forward.1} parent=92 // pred_fallthru
          _
        %v451 = vld [vmem:[%s1] sm:$0x77]
        %v452 = vld [vmem:[%s1 + $0x8] sm:$0x77]
        %v453 = vld [vmem:[%s404] sm:$0x1]
        %v454 = vld [vmem:[%s404 + $0x4] sm:$0x1]
        %v455 = vld [vmem:[%s404 + $0x8] sm:$0x1]
        %v456 = vld [vmem:[%s404 + $0xc] sm:$0x1]
        %v457 = vld [vmem:[%s404 + $0x10] sm:$0x1]
        %v458 = vld [vmem:[%s404 + $0x14] sm:$0x1]
        %v459 = vld [vmem:[%s404 + $0x18] sm:$0x1]
        %v460 = vld [vmem:[%s404 + $0x1c] sm:$0x1]
        %v469 = vrot.slane %v454, 7
        %vm470 = vcmask 1041409
        %v471 = vsel %vm470, %v469, %v453
        %v472 = vrot.slane %v455, 6
        %vm473 = vcmask 1042434
        %v474 = vsel %vm473, %v472, %v471
        %v475 = vrot.slane %v456, 5
        %vm476 = vcmask 1043459
        %v477 = vsel %vm476, %v475, %v474
        %v478 = vrot.slane %v457, 4
        %vm479 = vcmask 1044484
        %v480 = vsel %vm479, %v478, %v477
        %v481 = vrot.slane %v458, 3
        %vm482 = vcmask 1045509
        %v483 = vsel %vm482, %v481, %v480
        %v484 = vrot.slane %v459, 2
        %vm485 = vcmask 1046534
        %v486 = vsel %vm485, %v484, %v483
        %v487 = vrot.slane %v460, 1
        %vm488 = vcmask 1047559
        %v489 = vsel %vm488, %v487, %v486
        %491 = vadd.xlane.f32.xlu0 %v489
        %v492 = vpop.xlane.xlu0 %491
        %v493 = vld [vmem:[#allocation2] sm:$0xff]
        %v494 = vld [vmem:[#allocation2 + $0x8] sm:$0xff]
        %v495 = vld [vmem:[#allocation2 + $0x10] sm:$0xff]
        %v496 = vld [vmem:[#allocation2 + $0x18] sm:$0xff]
        %v499 = vlaneseq
        %v500 = vshrl.u32 %v499, 7
        %v501 = vsub.s32 0, %v500
        %v502 = vrot.slane %v451, %v501
        %v503 = vlaneseq
        %v504 = vshrl.u32 %v503, 7
        %v505 = vsub.s32 4, %v504
        %v506 = vrot.slane %v451, %v505
        %v507 = vlaneseq
        %v508 = vshrl.u32 %v507, 7
        %v509 = vsub.s32 0, %v508
        %v510 = vrot.slane %v452, %v509
        %v511 = vlaneseq
        %v512 = vshrl.u32 %v511, 7
        %v513 = vsub.s32 4, %v512
        %v514 = vrot.slane %v452, %v513
        %v519 = vlaneseq
        %v520 = vshrl.u32 %v519, 7
        %v521 = vsub.s32 0, %v520
        %v522 = vrot.slane %v502, %v521
        %v523 = vlaneseq
        %v524 = vshrl.u32 %v523, 7
        %v525 = vsub.s32 0, %v524
        %v526 = vrot.slane %v506, %v525
        %v527 = vlaneseq
        %v528 = vshrl.u32 %v527, 7
        %v529 = vsub.s32 0, %v528
        %v530 = vrot.slane %v510, %v529
        %v531 = vlaneseq
        %v532 = vshrl.u32 %v531, 7
        %v533 = vsub.s32 0, %v532
        %v534 = vrot.slane %v514, %v533
        %v535 = vmul.f32 %v492, %v522
        %v536 = vmul.f32 %v492, %v526
        %v537 = vmul.f32 %v492, %v530
        %v538 = vmul.f32 %v492, %v534
        %v539 = vadd.f32 %v493, %v535
        %v540 = vadd.f32 %v494, %v536
        %v541 = vadd.f32 %v495, %v537
        %v542 = vadd.f32 %v496, %v538
        %543 = vst [vmem:[#allocation2] sm:$0xff] %v539
        %544 = vst [vmem:[#allocation2 + $0x8] sm:$0xff] %v540
        %545 = vst [vmem:[#allocation2 + $0x10] sm:$0xff] %v541
        %546 = vst [vmem:[#allocation2 + $0x18] sm:$0xff] %v542
        %v547 = vld [vmem:[%s404 + $0x1] sm:$0x1]
        %v548 = vld [vmem:[%s404 + $0x5] sm:$0x1]
        %v549 = vld [vmem:[%s404 + $0x9] sm:$0x1]
        %v550 = vld [vmem:[%s404 + $0xd] sm:$0x1]
        %v551 = vld [vmem:[%s404 + $0x11] sm:$0x1]
        %v552 = vld [vmem:[%s404 + $0x15] sm:$0x1]
        %v553 = vld [vmem:[%s404 + $0x19] sm:$0x1]
        %v554 = vld [vmem:[%s404 + $0x1d] sm:$0x1]
        %v563 = vrot.slane %v548, 7
        %v564 = vsel %vm470, %v563, %v547
        %v565 = vrot.slane %v549, 6
        %v566 = vsel %vm473, %v565, %v564
        %v567 = vrot.slane %v550, 5
        %v568 = vsel %vm476, %v567, %v566
        %v569 = vrot.slane %v551, 4
        %v570 = vsel %vm479, %v569, %v568
        %v571 = vrot.slane %v552, 3
        %v572 = vsel %vm482, %v571, %v570
        %v573 = vrot.slane %v553, 2
        %v574 = vsel %vm485, %v573, %v572
        %v575 = vrot.slane %v554, 1
        %v576 = vsel %vm488, %v575, %v574
        %578 = vadd.xlane.f32.xlu0 %v576
        %v579 = vpop.xlane.xlu0 %578
        %v580 = vld [vmem:[#allocation2] sm:$0xff]
        %v581 = vld [vmem:[#allocation2 + $0x8] sm:$0xff]
        %v582 = vld [vmem:[#allocation2 + $0x10] sm:$0xff]
        %v583 = vld [vmem:[#allocation2 + $0x18] sm:$0xff]
        %v584 = vlaneseq
        %v585 = vshrl.u32 %v584, 7
        %v586 = vsub.s32 1, %v585
        %v587 = vrot.slane %v451, %v586
        %v588 = vlaneseq
        %v589 = vshrl.u32 %v588, 7
        %v590 = vsub.s32 5, %v589
        %v591 = vrot.slane %v451, %v590
        %v592 = vlaneseq
        %v593 = vshrl.u32 %v592, 7
        %v594 = vsub.s32 1, %v593
        %v595 = vrot.slane %v452, %v594
        %v596 = vlaneseq
        %v597 = vshrl.u32 %v596, 7
        %v598 = vsub.s32 5, %v597
        %v599 = vrot.slane %v452, %v598
        %v604 = vlaneseq
        %v605 = vshrl.u32 %v604, 7
        %v606 = vsub.s32 1, %v605
        %v607 = vrot.slane %v587, %v606
        %v608 = vlaneseq
        %v609 = vshrl.u32 %v608, 7
        %v610 = vsub.s32 1, %v609
        %v611 = vrot.slane %v591, %v610
        %v612 = vlaneseq
        %v613 = vshrl.u32 %v612, 7
        %v614 = vsub.s32 1, %v613
        %v615 = vrot.slane %v595, %v614
        %v616 = vlaneseq
        %v617 = vshrl.u32 %v616, 7
        %v618 = vsub.s32 1, %v617
        %v619 = vrot.slane %v599, %v618
        %v620 = vmul.f32 %v579, %v607
        %v621 = vmul.f32 %v579, %v611
        %v622 = vmul.f32 %v579, %v615
        %v623 = vmul.f32 %v579, %v619
        %v624 = vadd.f32 %v580, %v620
        %v625 = vadd.f32 %v581, %v621
        %v626 = vadd.f32 %v582, %v622
        %v627 = vadd.f32 %v583, %v623
        %628 = vst [vmem:[#allocation2] sm:$0xff] %v624
        %629 = vst [vmem:[#allocation2 + $0x8] sm:$0xff] %v625
        %630 = vst [vmem:[#allocation2 + $0x10] sm:$0xff] %v626
        %631 = vst [vmem:[#allocation2 + $0x18] sm:$0xff] %v627
        %v632 = vld [vmem:[%s404 + $0x2] sm:$0x1]
        %v633 = vld [vmem:[%s404 + $0x6] sm:$0x1]
        %v634 = vld [vmem:[%s404 + $0xa] sm:$0x1]
        %v635 = vld [vmem:[%s404 + $0xe] sm:$0x1]
        %v636 = vld [vmem:[%s404 + $0x12] sm:$0x1]
        %v637 = vld [vmem:[%s404 + $0x16] sm:$0x1]
        %v638 = vld [vmem:[%s404 + $0x1a] sm:$0x1]
        %v639 = vld [vmem:[%s404 + $0x1e] sm:$0x1]
        %v648 = vrot.slane %v633, 7
        %v649 = vsel %vm470, %v648, %v632
        %v650 = vrot.slane %v634, 6
        %v651 = vsel %vm473, %v650, %v649
        %v652 = vrot.slane %v635, 5
        %v653 = vsel %vm476, %v652, %v651
        %v654 = vrot.slane %v636, 4
        %v655 = vsel %vm479, %v654, %v653
        %v656 = vrot.slane %v637, 3
        %v657 = vsel %vm482, %v656, %v655
        %v658 = vrot.slane %v638, 2
        %v659 = vsel %vm485, %v658, %v657
        %v660 = vrot.slane %v639, 1
        %v661 = vsel %vm488, %v660, %v659
        %663 = vadd.xlane.f32.xlu0 %v661
        %v664 = vpop.xlane.xlu0 %663
        %v665 = vld [vmem:[#allocation2] sm:$0xff]
        %v666 = vld [vmem:[#allocation2 + $0x8] sm:$0xff]
        %v667 = vld [vmem:[#allocation2 + $0x10] sm:$0xff]
        %v668 = vld [vmem:[#allocation2 + $0x18] sm:$0xff]
        %v669 = vlaneseq
        %v670 = vshrl.u32 %v669, 7
        %v671 = vsub.s32 2, %v670
        %v672 = vrot.slane %v451, %v671
        %v673 = vlaneseq
        %v674 = vshrl.u32 %v673, 7
        %v675 = vsub.s32 6, %v674
        %v676 = vrot.slane %v451, %v675
        %v677 = vlaneseq
        %v678 = vshrl.u32 %v677, 7
        %v679 = vsub.s32 2, %v678
        %v680 = vrot.slane %v452, %v679
        %v681 = vlaneseq
        %v682 = vshrl.u32 %v681, 7
        %v683 = vsub.s32 6, %v682
        %v684 = vrot.slane %v452, %v683
        %v689 = vlaneseq
        %v690 = vshrl.u32 %v689, 7
        %v691 = vsub.s32 2, %v690
        %v692 = vrot.slane %v672, %v691
        %v693 = vlaneseq
        %v694 = vshrl.u32 %v693, 7
        %v695 = vsub.s32 2, %v694
        %v696 = vrot.slane %v676, %v695
        %v697 = vlaneseq
        %v698 = vshrl.u32 %v697, 7
        %v699 = vsub.s32 2, %v698
        %v700 = vrot.slane %v680, %v699
        %v701 = vlaneseq
        %v702 = vshrl.u32 %v701, 7
        %v703 = vsub.s32 2, %v702
        %v704 = vrot.slane %v684, %v703
        %v705 = vmul.f32 %v664, %v692
        %v706 = vmul.f32 %v664, %v696
        %v707 = vmul.f32 %v664, %v700
        %v708 = vmul.f32 %v664, %v704
        %v709 = vadd.f32 %v665, %v705
        %v710 = vadd.f32 %v666, %v706
        %v711 = vadd.f32 %v667, %v707
        %v712 = vadd.f32 %v668, %v708
        %713 = vst [vmem:[#allocation2] sm:$0xff] %v709
        %714 = vst [vmem:[#allocation2 + $0x8] sm:$0xff] %v710
        %715 = vst [vmem:[#allocation2 + $0x10] sm:$0xff] %v711
        %716 = vst [vmem:[#allocation2 + $0x18] sm:$0xff] %v712
        %p717 = scmp.eq.s32.totalorder %s24, 1
        // Predicated region
        $region110: #{head_forward.1} parent=92 // pred_check
          %p718 = pneg %p717
        $region111: #{head_forward.1} parent=92 // pred_check_branch
          %720 = sbr.rel (%p718) target = $region113
        $region112: #{head_forward.1} parent=92 // pred_region
          %v721 = vld [vmem:[#allocation2] sm:$0xff]
          %v722 = vld [vmem:[#allocation2 + $0x8] sm:$0xff]
          %v723 = vld [vmem:[#allocation2 + $0x10] sm:$0xff]
          %v724 = vld [vmem:[#allocation2 + $0x18] sm:$0xff]
          %v725 = vmul.f32 %v721, 0.00390625
          %v726 = vmul.f32 %v722, 0.00390625
          %v727 = vmul.f32 %v723, 0.00390625
          %v728 = vmul.f32 %v724, 0.00390625
          %v729 = vld [vmem:[%s2] sm:$0xf]
          %v731 = vlaneseq
          %v732 = vshrl.u32 %v731, 7
          %v733 = vsub.s32 0, %v732
          %v734 = vrot.slane %v729, %v733
          %v735 = vlaneseq
          %v736 = vshrl.u32 %v735, 7
          %v737 = vsub.s32 1, %v736
          %v738 = vrot.slane %v729, %v737
          %v739 = vlaneseq
          %v740 = vshrl.u32 %v739, 7
          %v741 = vsub.s32 2, %v740
          %v742 = vrot.slane %v729, %v741
          %v743 = vlaneseq
          %v744 = vshrl.u32 %v743, 7
          %v745 = vsub.s32 3, %v744
          %v746 = vrot.slane %v729, %v745
          %v751 = vadd.f32 %v725, %v734
          %v752 = vadd.f32 %v726, %v738
          %v753 = vadd.f32 %v727, %v742
          %v754 = vadd.f32 %v728, %v746
          %v755 = vmax.f32 %v751, 0.0
          %v756 = vmax.f32 %v752, 0.0
          %v757 = vmax.f32 %v753, 0.0
          %v758 = vmax.f32 %v754, 0.0
          %v759 = vpack.c.bf16 %v755, %v755
          %v760 = vpack.c.bf16 %v756, %v756
          %v761 = vpack.c.bf16 %v757, %v757
          %v762 = vpack.c.bf16 %v758, %v758
          %v763 = vld [vmem:[#allocation4] sm:$0xff]
          %v764 = vld [vmem:[#allocation4 + $0x8] sm:$0xff]
          %v765 = vld [vmem:[#allocation4 + $0x10] sm:$0xff]
          %v766 = vld [vmem:[#allocation4 + $0x18] sm:$0xff]
          %v767 = vld [vmem:[#allocation4 + $0x20] sm:$0xff]
          %v768 = vld [vmem:[#allocation4 + $0x28] sm:$0xff]
          %v769 = vld [vmem:[#allocation4 + $0x30] sm:$0xff]
          %v770 = vld [vmem:[#allocation4 + $0x38] sm:$0xff]
          %v771 = vld [vmem:[#allocation4 + $0x40] sm:$0xff]
          %v772 = vld [vmem:[#allocation4 + $0x48] sm:$0xff]
          %v773 = vld [vmem:[#allocation4 + $0x50] sm:$0xff]
          %v774 = vld [vmem:[#allocation4 + $0x58] sm:$0xff]
          %v775 = vld [vmem:[#allocation4 + $0x60] sm:$0xff]
          %v776 = vld [vmem:[#allocation4 + $0x68] sm:$0xff]
          %v777 = vld [vmem:[#allocation4 + $0x70] sm:$0xff]
          %v778 = vld [vmem:[#allocation4 + $0x78] sm:$0xff]
          %v779 = vld [vmem:[#allocation4 + $0x80] sm:$0xff]
          %v780 = vld [vmem:[#allocation4 + $0x88] sm:$0xff]
          %v781 = vld [vmem:[#allocation4 + $0x90] sm:$0xff]
          %v782 = vld [vmem:[#allocation4 + $0x98] sm:$0xff]
          %v783 = vld [vmem:[#allocation4 + $0xa0] sm:$0xff]
          %v784 = vld [vmem:[#allocation4 + $0xa8] sm:$0xff]
          %v785 = vld [vmem:[#allocation4 + $0xb0] sm:$0xff]
          %v786 = vld [vmem:[#allocation4 + $0xb8] sm:$0xff]
          %v787 = vld [vmem:[#allocation4 + $0xc0] sm:$0xff]
          %v788 = vld [vmem:[#allocation4 + $0xc8] sm:$0xff]
          %v789 = vld [vmem:[#allocation4 + $0xd0] sm:$0xff]
          %v790 = vld [vmem:[#allocation4 + $0xd8] sm:$0xff]
          %v791 = vld [vmem:[#allocation4 + $0xe0] sm:$0xff]
          %v792 = vld [vmem:[#allocation4 + $0xe8] sm:$0xff]
          %v793 = vld [vmem:[#allocation4 + $0xf0] sm:$0xff]
          %v794 = vld [vmem:[#allocation4 + $0xf8] sm:$0xff]
          %v795 = vld [vmem:[#allocation4 + $0x100] sm:$0xff]
          %v796 = vld [vmem:[#allocation4 + $0x108] sm:$0xff]
          %v797 = vld [vmem:[#allocation4 + $0x110] sm:$0xff]
          %v798 = vld [vmem:[#allocation4 + $0x118] sm:$0xff]
          %v799 = vld [vmem:[#allocation4 + $0x120] sm:$0xff]
          %v800 = vld [vmem:[#allocation4 + $0x128] sm:$0xff]
          %v801 = vld [vmem:[#allocation4 + $0x130] sm:$0xff]
          %v802 = vld [vmem:[#allocation4 + $0x138] sm:$0xff]
          %v803 = vld [vmem:[#allocation4 + $0x140] sm:$0xff]
          %v804 = vld [vmem:[#allocation4 + $0x148] sm:$0xff]
          %v805 = vld [vmem:[#allocation4 + $0x150] sm:$0xff]
          %v806 = vld [vmem:[#allocation4 + $0x158] sm:$0xff]
          %v807 = vld [vmem:[#allocation4 + $0x160] sm:$0xff]
          %v808 = vld [vmem:[#allocation4 + $0x168] sm:$0xff]
          %v809 = vld [vmem:[#allocation4 + $0x170] sm:$0xff]
          %v810 = vld [vmem:[#allocation4 + $0x178] sm:$0xff]
          %v811 = vld [vmem:[#allocation4 + $0x180] sm:$0xff]
          %v812 = vld [vmem:[#allocation4 + $0x188] sm:$0xff]
          %v813 = vld [vmem:[#allocation4 + $0x190] sm:$0xff]
          %v814 = vld [vmem:[#allocation4 + $0x198] sm:$0xff]
          %v815 = vld [vmem:[#allocation4 + $0x1a0] sm:$0xff]
          %v816 = vld [vmem:[#allocation4 + $0x1a8] sm:$0xff]
          %v817 = vld [vmem:[#allocation4 + $0x1b0] sm:$0xff]
          %v818 = vld [vmem:[#allocation4 + $0x1b8] sm:$0xff]
          %v819 = vld [vmem:[#allocation4 + $0x1c0] sm:$0xff]
          %v820 = vld [vmem:[#allocation4 + $0x1c8] sm:$0xff]
          %v821 = vld [vmem:[#allocation4 + $0x1d0] sm:$0xff]
          %v822 = vld [vmem:[#allocation4 + $0x1d8] sm:$0xff]
          %v823 = vld [vmem:[#allocation4 + $0x1e0] sm:$0xff]
          %v824 = vld [vmem:[#allocation4 + $0x1e8] sm:$0xff]
          %v825 = vld [vmem:[#allocation4 + $0x1f0] sm:$0xff]
          %v826 = vld [vmem:[#allocation4 + $0x1f8] sm:$0xff]
          %v827 = vld [vmem:[#allocation4 + $0x200] sm:$0xff]
          %v828 = vld [vmem:[#allocation4 + $0x208] sm:$0xff]
          %v829 = vld [vmem:[#allocation4 + $0x210] sm:$0xff]
          %v830 = vld [vmem:[#allocation4 + $0x218] sm:$0xff]
          %v831 = vld [vmem:[#allocation4 + $0x220] sm:$0xff]
          %v832 = vld [vmem:[#allocation4 + $0x228] sm:$0xff]
          %v833 = vld [vmem:[#allocation4 + $0x230] sm:$0xff]
          %v834 = vld [vmem:[#allocation4 + $0x238] sm:$0xff]
          %v835 = vld [vmem:[#allocation4 + $0x240] sm:$0xff]
          %v836 = vld [vmem:[#allocation4 + $0x248] sm:$0xff]
          %v837 = vld [vmem:[#allocation4 + $0x250] sm:$0xff]
          %v838 = vld [vmem:[#allocation4 + $0x258] sm:$0xff]
          %v839 = vld [vmem:[#allocation4 + $0x260] sm:$0xff]
          %v840 = vld [vmem:[#allocation4 + $0x268] sm:$0xff]
          %v841 = vld [vmem:[#allocation4 + $0x270] sm:$0xff]
          %v842 = vld [vmem:[#allocation4 + $0x278] sm:$0xff]
          %v843 = vld [vmem:[#allocation4 + $0x280] sm:$0xff]
          %v844 = vld [vmem:[#allocation4 + $0x288] sm:$0xff]
          %v845 = vld [vmem:[#allocation4 + $0x290] sm:$0xff]
          %v846 = vld [vmem:[#allocation4 + $0x298] sm:$0xff]
          %v847 = vld [vmem:[#allocation4 + $0x2a0] sm:$0xff]
          %v848 = vld [vmem:[#allocation4 + $0x2a8] sm:$0xff]
          %v849 = vld [vmem:[#allocation4 + $0x2b0] sm:$0xff]
          %v850 = vld [vmem:[#allocation4 + $0x2b8] sm:$0xff]
          %v851 = vld [vmem:[#allocation4 + $0x2c0] sm:$0xff]
          %v852 = vld [vmem:[#allocation4 + $0x2c8] sm:$0xff]
          %v853 = vld [vmem:[#allocation4 + $0x2d0] sm:$0xff]
          %v854 = vld [vmem:[#allocation4 + $0x2d8] sm:$0xff]
          %v855 = vld [vmem:[#allocation4 + $0x2e0] sm:$0xff]
          %v856 = vld [vmem:[#allocation4 + $0x2e8] sm:$0xff]
          %v857 = vld [vmem:[#allocation4 + $0x2f0] sm:$0xff]
          %v858 = vld [vmem:[#allocation4 + $0x2f8] sm:$0xff]
          %v859 = vld [vmem:[#allocation4 + $0x300] sm:$0xff]
          %v860 = vld [vmem:[#allocation4 + $0x308] sm:$0xff]
          %v861 = vld [vmem:[#allocation4 + $0x310] sm:$0xff]
          %v862 = vld [vmem:[#allocation4 + $0x318] sm:$0xff]
          %v863 = vld [vmem:[#allocation4 + $0x320] sm:$0xff]
          %v864 = vld [vmem:[#allocation4 + $0x328] sm:$0xff]
          %v865 = vld [vmem:[#allocation4 + $0x330] sm:$0xff]
          %v866 = vld [vmem:[#allocation4 + $0x338] sm:$0xff]
          %v867 = vld [vmem:[#allocation4 + $0x340] sm:$0xff]
          %v868 = vld [vmem:[#allocation4 + $0x348] sm:$0xff]
          %v869 = vld [vmem:[#allocation4 + $0x350] sm:$0xff]
          %v870 = vld [vmem:[#allocation4 + $0x358] sm:$0xff]
          %v871 = vld [vmem:[#allocation4 + $0x360] sm:$0xff]
          %v872 = vld [vmem:[#allocation4 + $0x368] sm:$0xff]
          %v873 = vld [vmem:[#allocation4 + $0x370] sm:$0xff]
          %v874 = vld [vmem:[#allocation4 + $0x378] sm:$0xff]
          %v875 = vld [vmem:[#allocation4 + $0x380] sm:$0xff]
          %v876 = vld [vmem:[#allocation4 + $0x388] sm:$0xff]
          %v877 = vld [vmem:[#allocation4 + $0x390] sm:$0xff]
          %v878 = vld [vmem:[#allocation4 + $0x398] sm:$0xff]
          %v879 = vld [vmem:[#allocation4 + $0x3a0] sm:$0xff]
          %v880 = vld [vmem:[#allocation4 + $0x3a8] sm:$0xff]
          %v881 = vld [vmem:[#allocation4 + $0x3b0] sm:$0xff]
          %v882 = vld [vmem:[#allocation4 + $0x3b8] sm:$0xff]
          %v883 = vld [vmem:[#allocation4 + $0x3c0] sm:$0xff]
          %v884 = vld [vmem:[#allocation4 + $0x3c8] sm:$0xff]
          %v885 = vld [vmem:[#allocation4 + $0x3d0] sm:$0xff]
          %v886 = vld [vmem:[#allocation4 + $0x3d8] sm:$0xff]
          %v887 = vld [vmem:[#allocation4 + $0x3e0] sm:$0xff]
          %v888 = vld [vmem:[#allocation4 + $0x3e8] sm:$0xff]
          %v889 = vld [vmem:[#allocation4 + $0x3f0] sm:$0xff]
          %v890 = vld [vmem:[#allocation4 + $0x3f8] sm:$0xff]
          %v891 = vld [vmem:[%s4] sm:$0xf]
          %v893 = vlaneseq
          %v894 = vshrl.u32 %v893, 7
          %v895 = vsub.s32 0, %v894
          %v896 = vrot.slane %v891, %v895
          %v897 = vlaneseq
          %v898 = vshrl.u32 %v897, 7
          %v899 = vsub.s32 1, %v898
          %v900 = vrot.slane %v891, %v899
          %v901 = vlaneseq
          %v902 = vshrl.u32 %v901, 7
          %v903 = vsub.s32 2, %v902
          %v904 = vrot.slane %v891, %v903
          %v905 = vlaneseq
          %v906 = vshrl.u32 %v905, 7
          %v907 = vsub.s32 3, %v906
          %v908 = vrot.slane %v891, %v907
          %v1041 = vunpack.c.l.b16 %v763
          %v1042 = vunpack.c.h.b16 %v763
          %v1043 = vunpack.c.l.b16 %v764
          %v1044 = vunpack.c.h.b16 %v764
          %v1045 = vunpack.c.l.b16 %v765
          %v1046 = vunpack.c.h.b16 %v765
          %v1047 = vunpack.c.l.b16 %v766
          %v1048 = vunpack.c.h.b16 %v766
          %v1049 = vunpack.c.l.b16 %v767
          %v1050 = vunpack.c.h.b16 %v767
          %v1051 = vunpack.c.l.b16 %v768
          %v1052 = vunpack.c.h.b16 %v768
          %v1053 = vunpack.c.l.b16 %v769
          %v1054 = vunpack.c.h.b16 %v769
          %v1055 = vunpack.c.l.b16 %v770
          %v1056 = vunpack.c.h.b16 %v770
          %v1057 = vunpack.c.l.b16 %v771
          %v1058 = vunpack.c.h.b16 %v771
          %v1059 = vunpack.c.l.b16 %v772
          %v1060 = vunpack.c.h.b16 %v772
          %v1061 = vunpack.c.l.b16 %v773
          %v1062 = vunpack.c.h.b16 %v773
          %v1063 = vunpack.c.l.b16 %v774
          %v1064 = vunpack.c.h.b16 %v774
          %v1065 = vunpack.c.l.b16 %v775
          %v1066 = vunpack.c.h.b16 %v775
          %v1067 = vunpack.c.l.b16 %v776
          %v1068 = vunpack.c.h.b16 %v776
          %v1069 = vunpack.c.l.b16 %v777
          %v1070 = vunpack.c.h.b16 %v777
          %v1071 = vunpack.c.l.b16 %v778
          %v1072 = vunpack.c.h.b16 %v778
          %v1073 = vunpack.c.l.b16 %v779
          %v1074 = vunpack.c.h.b16 %v779
          %v1075 = vunpack.c.l.b16 %v780
          %v1076 = vunpack.c.h.b16 %v780
          %v1077 = vunpack.c.l.b16 %v781
          %v1078 = vunpack.c.h.b16 %v781
          %v1079 = vunpack.c.l.b16 %v782
          %v1080 = vunpack.c.h.b16 %v782
          %v1081 = vunpack.c.l.b16 %v783
          %v1082 = vunpack.c.h.b16 %v783
          %v1083 = vunpack.c.l.b16 %v784
          %v1084 = vunpack.c.h.b16 %v784
          %v1085 = vunpack.c.l.b16 %v785
          %v1086 = vunpack.c.h.b16 %v785
          %v1087 = vunpack.c.l.b16 %v786
          %v1088 = vunpack.c.h.b16 %v786
          %v1089 = vunpack.c.l.b16 %v787
          %v1090 = vunpack.c.h.b16 %v787
          %v1091 = vunpack.c.l.b16 %v788
          %v1092 = vunpack.c.h.b16 %v788
          %v1093 = vunpack.c.l.b16 %v789
          %v1094 = vunpack.c.h.b16 %v789
          %v1095 = vunpack.c.l.b16 %v790
          %v1096 = vunpack.c.h.b16 %v790
          %v1097 = vunpack.c.l.b16 %v791
          %v1098 = vunpack.c.h.b16 %v791
          %v1099 = vunpack.c.l.b16 %v792
          %v1100 = vunpack.c.h.b16 %v792
          %v1101 = vunpack.c.l.b16 %v793
          %v1102 = vunpack.c.h.b16 %v793
          %v1103 = vunpack.c.l.b16 %v794
          %v1104 = vunpack.c.h.b16 %v794
          %v1105 = vunpack.c.l.b16 %v795
          %v1106 = vunpack.c.h.b16 %v795
          %v1107 = vunpack.c.l.b16 %v796
          %v1108 = vunpack.c.h.b16 %v796
          %v1109 = vunpack.c.l.b16 %v797
          %v1110 = vunpack.c.h.b16 %v797
          %v1111 = vunpack.c.l.b16 %v798
          %v1112 = vunpack.c.h.b16 %v798
          %v1113 = vunpack.c.l.b16 %v799
          %v1114 = vunpack.c.h.b16 %v799
          %v1115 = vunpack.c.l.b16 %v800
          %v1116 = vunpack.c.h.b16 %v800
          %v1117 = vunpack.c.l.b16 %v801
          %v1118 = vunpack.c.h.b16 %v801
          %v1119 = vunpack.c.l.b16 %v802
          %v1120 = vunpack.c.h.b16 %v802
          %v1121 = vunpack.c.l.b16 %v803
          %v1122 = vunpack.c.h.b16 %v803
          %v1123 = vunpack.c.l.b16 %v804
          %v1124 = vunpack.c.h.b16 %v804
          %v1125 = vunpack.c.l.b16 %v805
          %v1126 = vunpack.c.h.b16 %v805
          %v1127 = vunpack.c.l.b16 %v806
          %v1128 = vunpack.c.h.b16 %v806
          %v1129 = vunpack.c.l.b16 %v807
          %v1130 = vunpack.c.h.b16 %v807
          %v1131 = vunpack.c.l.b16 %v808
          %v1132 = vunpack.c.h.b16 %v808
          %v1133 = vunpack.c.l.b16 %v809
          %v1134 = vunpack.c.h.b16 %v809
          %v1135 = vunpack.c.l.b16 %v810
          %v1136 = vunpack.c.h.b16 %v810
          %v1137 = vunpack.c.l.b16 %v811
          %v1138 = vunpack.c.h.b16 %v811
          %v1139 = vunpack.c.l.b16 %v812
          %v1140 = vunpack.c.h.b16 %v812
          %v1141 = vunpack.c.l.b16 %v813
          %v1142 = vunpack.c.h.b16 %v813
          %v1143 = vunpack.c.l.b16 %v814
          %v1144 = vunpack.c.h.b16 %v814
          %v1145 = vunpack.c.l.b16 %v815
          %v1146 = vunpack.c.h.b16 %v815
          %v1147 = vunpack.c.l.b16 %v816
          %v1148 = vunpack.c.h.b16 %v816
          %v1149 = vunpack.c.l.b16 %v817
          %v1150 = vunpack.c.h.b16 %v817
          %v1151 = vunpack.c.l.b16 %v818
          %v1152 = vunpack.c.h.b16 %v818
          %v1153 = vunpack.c.l.b16 %v819
          %v1154 = vunpack.c.h.b16 %v819
          %v1155 = vunpack.c.l.b16 %v820
          %v1156 = vunpack.c.h.b16 %v820
          %v1157 = vunpack.c.l.b16 %v821
          %v1158 = vunpack.c.h.b16 %v821
          %v1159 = vunpack.c.l.b16 %v822
          %v1160 = vunpack.c.h.b16 %v822
          %v1161 = vunpack.c.l.b16 %v823
          %v1162 = vunpack.c.h.b16 %v823
          %v1163 = vunpack.c.l.b16 %v824
          %v1164 = vunpack.c.h.b16 %v824
          %v1165 = vunpack.c.l.b16 %v825
          %v1166 = vunpack.c.h.b16 %v825
          %v1167 = vunpack.c.l.b16 %v826
          %v1168 = vunpack.c.h.b16 %v826
          %v1169 = vunpack.c.l.b16 %v827
          %v1170 = vunpack.c.h.b16 %v827
          %v1171 = vunpack.c.l.b16 %v828
          %v1172 = vunpack.c.h.b16 %v828
          %v1173 = vunpack.c.l.b16 %v829
          %v1174 = vunpack.c.h.b16 %v829
          %v1175 = vunpack.c.l.b16 %v830
          %v1176 = vunpack.c.h.b16 %v830
          %v1177 = vunpack.c.l.b16 %v831
          %v1178 = vunpack.c.h.b16 %v831
          %v1179 = vunpack.c.l.b16 %v832
          %v1180 = vunpack.c.h.b16 %v832
          %v1181 = vunpack.c.l.b16 %v833
          %v1182 = vunpack.c.h.b16 %v833
          %v1183 = vunpack.c.l.b16 %v834
          %v1184 = vunpack.c.h.b16 %v834
          %v1185 = vunpack.c.l.b16 %v835
          %v1186 = vunpack.c.h.b16 %v835
          %v1187 = vunpack.c.l.b16 %v836
          %v1188 = vunpack.c.h.b16 %v836
          %v1189 = vunpack.c.l.b16 %v837
          %v1190 = vunpack.c.h.b16 %v837
          %v1191 = vunpack.c.l.b16 %v838
          %v1192 = vunpack.c.h.b16 %v838
          %v1193 = vunpack.c.l.b16 %v839
          %v1194 = vunpack.c.h.b16 %v839
          %v1195 = vunpack.c.l.b16 %v840
          %v1196 = vunpack.c.h.b16 %v840
          %v1197 = vunpack.c.l.b16 %v841
          %v1198 = vunpack.c.h.b16 %v841
          %v1199 = vunpack.c.l.b16 %v842
          %v1200 = vunpack.c.h.b16 %v842
          %v1201 = vunpack.c.l.b16 %v843
          %v1202 = vunpack.c.h.b16 %v843
          %v1203 = vunpack.c.l.b16 %v844
          %v1204 = vunpack.c.h.b16 %v844
          %v1205 = vunpack.c.l.b16 %v845
          %v1206 = vunpack.c.h.b16 %v845
          %v1207 = vunpack.c.l.b16 %v846
          %v1208 = vunpack.c.h.b16 %v846
          %v1209 = vunpack.c.l.b16 %v847
          %v1210 = vunpack.c.h.b16 %v847
          %v1211 = vunpack.c.l.b16 %v848
          %v1212 = vunpack.c.h.b16 %v848
          %v1213 = vunpack.c.l.b16 %v849
          %v1214 = vunpack.c.h.b16 %v849
          %v1215 = vunpack.c.l.b16 %v850
          %v1216 = vunpack.c.h.b16 %v850
          %v1217 = vunpack.c.l.b16 %v851
          %v1218 = vunpack.c.h.b16 %v851
          %v1219 = vunpack.c.l.b16 %v852
          %v1220 = vunpack.c.h.b16 %v852
          %v1221 = vunpack.c.l.b16 %v853
          %v1222 = vunpack.c.h.b16 %v853
          %v1223 = vunpack.c.l.b16 %v854
          %v1224 = vunpack.c.h.b16 %v854
          %v1225 = vunpack.c.l.b16 %v855
          %v1226 = vunpack.c.h.b16 %v855
          %v1227 = vunpack.c.l.b16 %v856
          %v1228 = vunpack.c.h.b16 %v856
          %v1229 = vunpack.c.l.b16 %v857
          %v1230 = vunpack.c.h.b16 %v857
          %v1231 = vunpack.c.l.b16 %v858
          %v1232 = vunpack.c.h.b16 %v858
          %v1233 = vunpack.c.l.b16 %v859
          %v1234 = vunpack.c.h.b16 %v859
          %v1235 = vunpack.c.l.b16 %v860
          %v1236 = vunpack.c.h.b16 %v860
          %v1237 = vunpack.c.l.b16 %v861
          %v1238 = vunpack.c.h.b16 %v861
          %v1239 = vunpack.c.l.b16 %v862
          %v1240 = vunpack.c.h.b16 %v862
          %v1241 = vunpack.c.l.b16 %v863
          %v1242 = vunpack.c.h.b16 %v863
          %v1243 = vunpack.c.l.b16 %v864
          %v1244 = vunpack.c.h.b16 %v864
          %v1245 = vunpack.c.l.b16 %v865
          %v1246 = vunpack.c.h.b16 %v865
          %v1247 = vunpack.c.l.b16 %v866
          %v1248 = vunpack.c.h.b16 %v866
          %v1249 = vunpack.c.l.b16 %v867
          %v1250 = vunpack.c.h.b16 %v867
          %v1251 = vunpack.c.l.b16 %v868
          %v1252 = vunpack.c.h.b16 %v868
          %v1253 = vunpack.c.l.b16 %v869
          %v1254 = vunpack.c.h.b16 %v869
          %v1255 = vunpack.c.l.b16 %v870
          %v1256 = vunpack.c.h.b16 %v870
          %v1257 = vunpack.c.l.b16 %v871
          %v1258 = vunpack.c.h.b16 %v871
          %v1259 = vunpack.c.l.b16 %v872
          %v1260 = vunpack.c.h.b16 %v872
          %v1261 = vunpack.c.l.b16 %v873
          %v1262 = vunpack.c.h.b16 %v873
          %v1263 = vunpack.c.l.b16 %v874
          %v1264 = vunpack.c.h.b16 %v874
          %v1265 = vunpack.c.l.b16 %v875
          %v1266 = vunpack.c.h.b16 %v875
          %v1267 = vunpack.c.l.b16 %v876
          %v1268 = vunpack.c.h.b16 %v876
          %v1269 = vunpack.c.l.b16 %v877
          %v1270 = vunpack.c.h.b16 %v877
          %v1271 = vunpack.c.l.b16 %v878
          %v1272 = vunpack.c.h.b16 %v878
          %v1273 = vunpack.c.l.b16 %v879
          %v1274 = vunpack.c.h.b16 %v879
          %v1275 = vunpack.c.l.b16 %v880
          %v1276 = vunpack.c.h.b16 %v880
          %v1277 = vunpack.c.l.b16 %v881
          %v1278 = vunpack.c.h.b16 %v881
          %v1279 = vunpack.c.l.b16 %v882
          %v1280 = vunpack.c.h.b16 %v882
          %v1281 = vunpack.c.l.b16 %v883
          %v1282 = vunpack.c.h.b16 %v883
          %v1283 = vunpack.c.l.b16 %v884
          %v1284 = vunpack.c.h.b16 %v884
          %v1285 = vunpack.c.l.b16 %v885
          %v1286 = vunpack.c.h.b16 %v885
          %v1287 = vunpack.c.l.b16 %v886
          %v1288 = vunpack.c.h.b16 %v886
          %v1289 = vunpack.c.l.b16 %v887
          %v1290 = vunpack.c.h.b16 %v887
          %v1291 = vunpack.c.l.b16 %v888
          %v1292 = vunpack.c.h.b16 %v888
          %v1293 = vunpack.c.l.b16 %v889
          %v1294 = vunpack.c.h.b16 %v889
          %v1295 = vunpack.c.l.b16 %v890
          %v1296 = vunpack.c.h.b16 %v890
          %v1297 = vpack.c.b16 %v1045, %v1041
          %v1298 = vpack.c.b16 %v1046, %v1042
          %v1299 = vpack.c.b16 %v1047, %v1043
          %v1300 = vpack.c.b16 %v1048, %v1044
          %v1301 = vpack.c.b16 %v1053, %v1049
          %v1302 = vpack.c.b16 %v1054, %v1050
          %v1303 = vpack.c.b16 %v1055, %v1051
          %v1304 = vpack.c.b16 %v1056, %v1052
          %v1305 = vpack.c.b16 %v1061, %v1057
          %v1306 = vpack.c.b16 %v1062, %v1058
          %v1307 = vpack.c.b16 %v1063, %v1059
          %v1308 = vpack.c.b16 %v1064, %v1060
          %v1309 = vpack.c.b16 %v1069, %v1065
          %v1310 = vpack.c.b16 %v1070, %v1066
          %v1311 = vpack.c.b16 %v1071, %v1067
          %v1312 = vpack.c.b16 %v1072, %v1068
          %v1313 = vpack.c.b16 %v1077, %v1073
          %v1314 = vpack.c.b16 %v1078, %v1074
          %v1315 = vpack.c.b16 %v1079, %v1075
          %v1316 = vpack.c.b16 %v1080, %v1076
          %v1317 = vpack.c.b16 %v1085, %v1081
          %v1318 = vpack.c.b16 %v1086, %v1082
          %v1319 = vpack.c.b16 %v1087, %v1083
          %v1320 = vpack.c.b16 %v1088, %v1084
          %v1321 = vpack.c.b16 %v1093, %v1089
          %v1322 = vpack.c.b16 %v1094, %v1090
          %v1323 = vpack.c.b16 %v1095, %v1091
          %v1324 = vpack.c.b16 %v1096, %v1092
          %v1325 = vpack.c.b16 %v1101, %v1097
          %v1326 = vpack.c.b16 %v1102, %v1098
          %v1327 = vpack.c.b16 %v1103, %v1099
          %v1328 = vpack.c.b16 %v1104, %v1100
          %v1329 = vpack.c.b16 %v1109, %v1105
          %v1330 = vpack.c.b16 %v1110, %v1106
          %v1331 = vpack.c.b16 %v1111, %v1107
          %v1332 = vpack.c.b16 %v1112, %v1108
          %v1333 = vpack.c.b16 %v1117, %v1113
          %v1334 = vpack.c.b16 %v1118, %v1114
          %v1335 = vpack.c.b16 %v1119, %v1115
          %v1336 = vpack.c.b16 %v1120, %v1116
          %v1337 = vpack.c.b16 %v1125, %v1121
          %v1338 = vpack.c.b16 %v1126, %v1122
          %v1339 = vpack.c.b16 %v1127, %v1123
          %v1340 = vpack.c.b16 %v1128, %v1124
          %v1341 = vpack.c.b16 %v1133, %v1129
          %v1342 = vpack.c.b16 %v1134, %v1130
          %v1343 = vpack.c.b16 %v1135, %v1131
          %v1344 = vpack.c.b16 %v1136, %v1132
          %v1345 = vpack.c.b16 %v1141, %v1137
          %v1346 = vpack.c.b16 %v1142, %v1138
          %v1347 = vpack.c.b16 %v1143, %v1139
          %v1348 = vpack.c.b16 %v1144, %v1140
          %v1349 = vpack.c.b16 %v1149, %v1145
          %v1350 = vpack.c.b16 %v1150, %v1146
          %v1351 = vpack.c.b16 %v1151, %v1147
          %v1352 = vpack.c.b16 %v1152, %v1148
          %v1353 = vpack.c.b16 %v1157, %v1153
          %v1354 = vpack.c.b16 %v1158, %v1154
          %v1355 = vpack.c.b16 %v1159, %v1155
          %v1356 = vpack.c.b16 %v1160, %v1156
          %v1357 = vpack.c.b16 %v1165, %v1161
          %v1358 = vpack.c.b16 %v1166, %v1162
          %v1359 = vpack.c.b16 %v1167, %v1163
          %v1360 = vpack.c.b16 %v1168, %v1164
          %v1361 = vpack.c.b16 %v1173, %v1169
          %v1362 = vpack.c.b16 %v1174, %v1170
          %v1363 = vpack.c.b16 %v1175, %v1171
          %v1364 = vpack.c.b16 %v1176, %v1172
          %v1365 = vpack.c.b16 %v1181, %v1177
          %v1366 = vpack.c.b16 %v1182, %v1178
          %v1367 = vpack.c.b16 %v1183, %v1179
          %v1368 = vpack.c.b16 %v1184, %v1180
          %v1369 = vpack.c.b16 %v1189, %v1185
          %v1370 = vpack.c.b16 %v1190, %v1186
          %v1371 = vpack.c.b16 %v1191, %v1187
          %v1372 = vpack.c.b16 %v1192, %v1188
          %v1373 = vpack.c.b16 %v1197, %v1193
          %v1374 = vpack.c.b16 %v1198, %v1194
          %v1375 = vpack.c.b16 %v1199, %v1195
          %v1376 = vpack.c.b16 %v1200, %v1196
          %v1377 = vpack.c.b16 %v1205, %v1201
          %v1378 = vpack.c.b16 %v1206, %v1202
          %v1379 = vpack.c.b16 %v1207, %v1203
          %v1380 = vpack.c.b16 %v1208, %v1204
          %v1381 = vpack.c.b16 %v1213, %v1209
          %v1382 = vpack.c.b16 %v1214, %v1210
          %v1383 = vpack.c.b16 %v1215, %v1211
          %v1384 = vpack.c.b16 %v1216, %v1212
          %v1385 = vpack.c.b16 %v1221, %v1217
          %v1386 = vpack.c.b16 %v1222, %v1218
          %v1387 = vpack.c.b16 %v1223, %v1219
          %v1388 = vpack.c.b16 %v1224, %v1220
          %v1389 = vpack.c.b16 %v1229, %v1225
          %v1390 = vpack.c.b16 %v1230, %v1226
          %v1391 = vpack.c.b16 %v1231, %v1227
          %v1392 = vpack.c.b16 %v1232, %v1228
          %v1393 = vpack.c.b16 %v1237, %v1233
          %v1394 = vpack.c.b16 %v1238, %v1234
          %v1395 = vpack.c.b16 %v1239, %v1235
          %v1396 = vpack.c.b16 %v1240, %v1236
          %v1397 = vpack.c.b16 %v1245, %v1241
          %v1398 = vpack.c.b16 %v1246, %v1242
          %v1399 = vpack.c.b16 %v1247, %v1243
          %v1400 = vpack.c.b16 %v1248, %v1244
          %v1401 = vpack.c.b16 %v1253, %v1249
          %v1402 = vpack.c.b16 %v1254, %v1250
          %v1403 = vpack.c.b16 %v1255, %v1251
          %v1404 = vpack.c.b16 %v1256, %v1252
          %v1405 = vpack.c.b16 %v1261, %v1257
          %v1406 = vpack.c.b16 %v1262, %v1258
          %v1407 = vpack.c.b16 %v1263, %v1259
          %v1408 = vpack.c.b16 %v1264, %v1260
          %v1409 = vpack.c.b16 %v1269, %v1265
          %v1410 = vpack.c.b16 %v1270, %v1266
          %v1411 = vpack.c.b16 %v1271, %v1267
          %v1412 = vpack.c.b16 %v1272, %v1268
          %v1413 = vpack.c.b16 %v1277, %v1273
          %v1414 = vpack.c.b16 %v1278, %v1274
          %v1415 = vpack.c.b16 %v1279, %v1275
          %v1416 = vpack.c.b16 %v1280, %v1276
          %v1417 = vpack.c.b16 %v1285, %v1281
          %v1418 = vpack.c.b16 %v1286, %v1282
          %v1419 = vpack.c.b16 %v1287, %v1283
          %v1420 = vpack.c.b16 %v1288, %v1284
          %v1421 = vpack.c.b16 %v1293, %v1289
          %v1422 = vpack.c.b16 %v1294, %v1290
          %v1423 = vpack.c.b16 %v1295, %v1291
          %v1424 = vpack.c.b16 %v1296, %v1292
          %1553 = vmatprep.subr.bf16.mxu0 %v1298
          %1554 = vmatpush1.bf16.msra.mxu0 %v1297
          %1555 = vmatprep.subr.bf16.mxu0 %v1302
          %1556 = vmatpush1.bf16.msra.mxu0 %v1301
          %1557 = vmatprep.subr.bf16.mxu0 %v1306
          %1558 = vmatpush1.bf16.msra.mxu0 %v1305
          %1559 = vmatprep.subr.bf16.mxu0 %v1310
          %1560 = vmatpush1.bf16.msra.mxu0 %v1309
          %1561 = vmatprep.subr.bf16.mxu0 %v1314
          %1562 = vmatpush1.bf16.msra.mxu0 %v1313
          %1563 = vmatprep.subr.bf16.mxu0 %v1318
          %1564 = vmatpush1.bf16.msra.mxu0 %v1317
          %1565 = vmatprep.subr.bf16.mxu0 %v1322
          %1566 = vmatpush1.bf16.msra.mxu0 %v1321
          %1567 = vmatprep.subr.bf16.mxu0 %v1326
          %1568 = vmatpush1.bf16.msra.mxu0 %v1325
          %1569 = vmatprep.subr.bf16.mxu0 %v1330
          %1570 = vmatpush1.bf16.msra.mxu0 %v1329
          %1571 = vmatprep.subr.bf16.mxu0 %v1334
          %1572 = vmatpush1.bf16.msra.mxu0 %v1333
          %1573 = vmatprep.subr.bf16.mxu0 %v1338
          %1574 = vmatpush1.bf16.msra.mxu0 %v1337
          %1575 = vmatprep.subr.bf16.mxu0 %v1342
          %1576 = vmatpush1.bf16.msra.mxu0 %v1341
          %1577 = vmatprep.subr.bf16.mxu0 %v1346
          %1578 = vmatpush1.bf16.msra.mxu0 %v1345
          %1579 = vmatprep.subr.bf16.mxu0 %v1350
          %1580 = vmatpush1.bf16.msra.mxu0 %v1349
          %1581 = vmatprep.subr.bf16.mxu0 %v1354
          %1582 = vmatpush1.bf16.msra.mxu0 %v1353
          %1583 = vmatprep.subr.bf16.mxu0 %v1358
          %1584 = vmatpush1.bf16.msra.mxu0 %v1357
          %1585 = vmatprep.mubr.bf16.mxu0 %v760
          %1586 = vmatmul.mubr.bf16.gmra.mrb[0].mxu0 %v759
          %v1587 = vpop.f32.mrb[0].mxu0
          %v1588 = vadd.f32 %v896, %v1587
          %v1589 = vpop.f32.mrb[0].mxu0
          %v1590 = vadd.f32 %v900, %v1589
          %v1591 = vpop.f32.mrb[0].mxu0
          %v1592 = vpop.f32.mrb[0].mxu0
          %1593 = vdwg.mxu0
          %1594 = vmatprep.subr.bf16.mxu0 %v1362
          %1595 = vmatpush1.bf16.msra.mxu0 %v1361
          %1596 = vmatprep.subr.bf16.mxu0 %v1366
          %1597 = vmatpush1.bf16.msra.mxu0 %v1365
          %1598 = vmatprep.subr.bf16.mxu0 %v1370
          %1599 = vmatpush1.bf16.msra.mxu0 %v1369
          %1600 = vmatprep.subr.bf16.mxu0 %v1374
          %1601 = vmatpush1.bf16.msra.mxu0 %v1373
          %1602 = vmatprep.subr.bf16.mxu0 %v1378
          %1603 = vmatpush1.bf16.msra.mxu0 %v1377
          %1604 = vmatprep.subr.bf16.mxu0 %v1382
          %1605 = vmatpush1.bf16.msra.mxu0 %v1381
          %1606 = vmatprep.subr.bf16.mxu0 %v1386
          %1607 = vmatpush1.bf16.msra.mxu0 %v1385
          %1608 = vmatprep.subr.bf16.mxu0 %v1390
          %1609 = vmatpush1.bf16.msra.mxu0 %v1389
          %1610 = vmatprep.subr.bf16.mxu0 %v1394
          %1611 = vmatpush1.bf16.msra.mxu0 %v1393
          %1612 = vmatprep.subr.bf16.mxu0 %v1398
          %1613 = vmatpush1.bf16.msra.mxu0 %v1397
          %1614 = vmatprep.subr.bf16.mxu0 %v1402
          %1615 = vmatpush1.bf16.msra.mxu0 %v1401
          %1616 = vmatprep.subr.bf16.mxu0 %v1406
          %1617 = vmatpush1.bf16.msra.mxu0 %v1405
          %1618 = vmatprep.subr.bf16.mxu0 %v1410
          %1619 = vmatpush1.bf16.msra.mxu0 %v1409
          %1620 = vmatprep.subr.bf16.mxu0 %v1414
          %1621 = vmatpush1.bf16.msra.mxu0 %v1413
          %1622 = vmatprep.subr.bf16.mxu0 %v1418
          %1623 = vmatpush1.bf16.msra.mxu0 %v1417
          %1624 = vmatprep.subr.bf16.mxu0 %v1422
          %1625 = vmatpush1.bf16.msra.mxu0 %v1421
          %1626 = vmatprep.mubr.bf16.mxu0 %v762
          %1627 = vmatmul.mubr.bf16.gmra.mrb[0].mxu0 %v761
          %v1628 = vpop.f32.mrb[0].mxu0
          %v1629 = vadd.f32 %v1588, %v1628
          %v1630 = vpop.f32.mrb[0].mxu0
          %v1631 = vadd.f32 %v1590, %v1630
          %v1632 = vpop.f32.mrb[0].mxu0
          %v1633 = vpop.f32.mrb[0].mxu0
          %1634 = vdwg.mxu0
          %1635 = vmatprep.subr.bf16.mxu0 %v1300
          %1636 = vmatpush1.bf16.msra.mxu0 %v1299
          %1637 = vmatprep.subr.bf16.mxu0 %v1304
          %1638 = vmatpush1.bf16.msra.mxu0 %v1303
          %1639 = vmatprep.subr.bf16.mxu0 %v1308
          %1640 = vmatpush1.bf16.msra.mxu0 %v1307
          %1641 = vmatprep.subr.bf16.mxu0 %v1312
          %1642 = vmatpush1.bf16.msra.mxu0 %v1311
          %1643 = vmatprep.subr.bf16.mxu0 %v1316
          %1644 = vmatpush1.bf16.msra.mxu0 %v1315
          %1645 = vmatprep.subr.bf16.mxu0 %v1320
          %1646 = vmatpush1.bf16.msra.mxu0 %v1319
          %1647 = vmatprep.subr.bf16.mxu0 %v1324
          %1648 = vmatpush1.bf16.msra.mxu0 %v1323
          %1649 = vmatprep.subr.bf16.mxu0 %v1328
          %1650 = vmatpush1.bf16.msra.mxu0 %v1327
          %1651 = vmatprep.subr.bf16.mxu0 %v1332
          %1652 = vmatpush1.bf16.msra.mxu0 %v1331
          %1653 = vmatprep.subr.bf16.mxu0 %v1336
          %1654 = vmatpush1.bf16.msra.mxu0 %v1335
          %1655 = vmatprep.subr.bf16.mxu0 %v1340
          %1656 = vmatpush1.bf16.msra.mxu0 %v1339
          %1657 = vmatprep.subr.bf16.mxu0 %v1344
          %1658 = vmatpush1.bf16.msra.mxu0 %v1343
          %1659 = vmatprep.subr.bf16.mxu0 %v1348
          %1660 = vmatpush1.bf16.msra.mxu0 %v1347
          %1661 = vmatprep.subr.bf16.mxu0 %v1352
          %1662 = vmatpush1.bf16.msra.mxu0 %v1351
          %1663 = vmatprep.subr.bf16.mxu0 %v1356
          %1664 = vmatpush1.bf16.msra.mxu0 %v1355
          %1665 = vmatprep.subr.bf16.mxu0 %v1360
          %1666 = vmatpush1.bf16.msra.mxu0 %v1359
          %1667 = vmatprep.mubr.bf16.mxu0 %v760
          %1668 = vmatmul.mubr.bf16.gmra.mrb[0].mxu0 %v759
          %v1669 = vpop.f32.mrb[0].mxu0
          %v1670 = vadd.f32 %v904, %v1669
          %v1671 = vpop.f32.mrb[0].mxu0
          %v1672 = vadd.f32 %v908, %v1671
          %v1673 = vpop.f32.mrb[0].mxu0
          %v1674 = vpop.f32.mrb[0].mxu0
          %1675 = vdwg.mxu0
          %1676 = vmatprep.subr.bf16.mxu0 %v1364
          %1677 = vmatpush1.bf16.msra.mxu0 %v1363
          %1678 = vmatprep.subr.bf16.mxu0 %v1368
          %1679 = vmatpush1.bf16.msra.mxu0 %v1367
          %1680 = vmatprep.subr.bf16.mxu0 %v1372
          %1681 = vmatpush1.bf16.msra.mxu0 %v1371
          %1682 = vmatprep.subr.bf16.mxu0 %v1376
          %1683 = vmatpush1.bf16.msra.mxu0 %v1375
          %1684 = vmatprep.subr.bf16.mxu0 %v1380
          %1685 = vmatpush1.bf16.msra.mxu0 %v1379
          %1686 = vmatprep.subr.bf16.mxu0 %v1384
          %1687 = vmatpush1.bf16.msra.mxu0 %v1383
          %1688 = vmatprep.subr.bf16.mxu0 %v1388
          %1689 = vmatpush1.bf16.msra.mxu0 %v1387
          %1690 = vmatprep.subr.bf16.mxu0 %v1392
          %1691 = vmatpush1.bf16.msra.mxu0 %v1391
          %1692 = vmatprep.subr.bf16.mxu0 %v1396
          %1693 = vmatpush1.bf16.msra.mxu0 %v1395
          %1694 = vmatprep.subr.bf16.mxu0 %v1400
          %1695 = vmatpush1.bf16.msra.mxu0 %v1399
          %1696 = vmatprep.subr.bf16.mxu0 %v1404
          %1697 = vmatpush1.bf16.msra.mxu0 %v1403
          %1698 = vmatprep.subr.bf16.mxu0 %v1408
          %1699 = vmatpush1.bf16.msra.mxu0 %v1407
          %1700 = vmatprep.subr.bf16.mxu0 %v1412
          %1701 = vmatpush1.bf16.msra.mxu0 %v1411
          %1702 = vmatprep.subr.bf16.mxu0 %v1416
          %1703 = vmatpush1.bf16.msra.mxu0 %v1415
          %1704 = vmatprep.subr.bf16.mxu0 %v1420
          %1705 = vmatpush1.bf16.msra.mxu0 %v1419
          %1706 = vmatprep.subr.bf16.mxu0 %v1424
          %1707 = vmatpush1.bf16.msra.mxu0 %v1423
          %1708 = vmatprep.mubr.bf16.mxu0 %v762
          %1709 = vmatmul.mubr.bf16.gmra.mrb[0].mxu0 %v761
          %v1710 = vpop.f32.mrb[0].mxu0
          %v1711 = vadd.f32 %v1670, %v1710
          %v1712 = vpop.f32.mrb[0].mxu0
          %v1713 = vadd.f32 %v1672, %v1712
          %v1714 = vpop.f32.mrb[0].mxu0
          %v1715 = vpop.f32.mrb[0].mxu0
          %1716 = vdwg.mxu0
          %v1717 = vrot.slane %v1629, 4
          %v1718 = vadd.f32 %v1629, %v1717
          %v1719 = vrot.slane %v1718, 2
          %v1720 = vadd.f32 %v1718, %v1719
          %v1721 = vrot.slane %v1720, 1
          %v1722 = vadd.f32 %v1720, %v1721
          %v1723 = vrot.slane %v1631, 4
          %v1724 = vadd.f32 %v1631, %v1723
          %v1725 = vrot.slane %v1724, 2
          %v1726 = vadd.f32 %v1724, %v1725
          %v1727 = vrot.slane %v1726, 1
          %v1728 = vadd.f32 %v1726, %v1727
          %v1729 = vrot.slane %v1711, 4
          %v1730 = vadd.f32 %v1711, %v1729
          %v1731 = vrot.slane %v1730, 2
          %v1732 = vadd.f32 %v1730, %v1731
          %v1733 = vrot.slane %v1732, 1
          %v1734 = vadd.f32 %v1732, %v1733
          %v1735 = vrot.slane %v1713, 4
          %v1736 = vadd.f32 %v1713, %v1735
          %v1737 = vrot.slane %v1736, 2
          %v1738 = vadd.f32 %v1736, %v1737
          %v1739 = vrot.slane %v1738, 1
          %v1740 = vadd.f32 %v1738, %v1739
          %v1741 = vrcp.pop 8.0
          %v1742 = vmul.f32 %v1722, %v1741
          %v1743 = vmul.f32 %v1728, %v1741
          %v1744 = vmul.f32 %v1734, %v1741
          %v1745 = vmul.f32 %v1740, %v1741
          %v1746 = vsub.f32 %v1629, %v1742
          %v1747 = vsub.f32 %v1631, %v1743
          %v1748 = vsub.f32 %v1711, %v1744
          %v1749 = vsub.f32 %v1713, %v1745
          %v1750 = vmul.f32 %v1746, %v1746
          %v1751 = vmul.f32 %v1747, %v1747
          %v1752 = vmul.f32 %v1748, %v1748
          %v1753 = vmul.f32 %v1749, %v1749
          %v1754 = vrot.slane %v1750, 4
          %v1755 = vadd.f32 %v1750, %v1754
          %v1756 = vrot.slane %v1755, 2
          %v1757 = vadd.f32 %v1755, %v1756
          %v1758 = vrot.slane %v1757, 1
          %v1759 = vadd.f32 %v1757, %v1758
          %v1760 = vrot.slane %v1751, 4
          %v1761 = vadd.f32 %v1751, %v1760
          %v1762 = vrot.slane %v1761, 2
          %v1763 = vadd.f32 %v1761, %v1762
          %v1764 = vrot.slane %v1763, 1
          %v1765 = vadd.f32 %v1763, %v1764
          %v1766 = vrot.slane %v1752, 4
          %v1767 = vadd.f32 %v1752, %v1766
          %v1768 = vrot.slane %v1767, 2
          %v1769 = vadd.f32 %v1767, %v1768
          %v1770 = vrot.slane %v1769, 1
          %v1771 = vadd.f32 %v1769, %v1770
          %v1772 = vrot.slane %v1753, 4
          %v1773 = vadd.f32 %v1753, %v1772
          %v1774 = vrot.slane %v1773, 2
          %v1775 = vadd.f32 %v1773, %v1774
          %v1776 = vrot.slane %v1775, 1
          %v1777 = vadd.f32 %v1775, %v1776
          %v1778 = vmul.f32 %v1759, %v1741
          %v1779 = vmul.f32 %v1765, %v1741
          %v1780 = vmul.f32 %v1771, %v1741
          %v1781 = vmul.f32 %v1777, %v1741
          %v1782 = vld [vmem:[%s5] sm:$0xf]
          %v1783 = vadd.f32 %v1778, 1e-05
          %v1784 = vadd.f32 %v1779, 1e-05
          %v1785 = vadd.f32 %v1780, 1e-05
          %v1786 = vadd.f32 %v1781, 1e-05
          %v1787 = vrsqrt.pop %v1783
          %v1788 = vrsqrt.pop %v1784
          %v1789 = vrsqrt.pop %v1785
          %v1790 = vrsqrt.pop %v1786
          %v1795 = vcombine.low %v1787, %v1788
          %v1796 = vcombine.low %v1789, %v1790
          %v1798 = vunpack.c.l.s4 1966171168
          %v1799 = vunpack.c.0.s8 %v1798
          %v1800 = vlaneseq
          %v1801 = vshrl.u32 %v1800, 7
          %v1802 = vsub.s32 %v1799, %v1801
          %v1803 = vrot.slane %v1795, %v1802
          %v1805 = vunpack.c.l.s4 1966171168
          %v1806 = vunpack.c.0.s8 %v1805
          %v1807 = vlaneseq
          %v1808 = vshrl.u32 %v1807, 7
          %v1809 = vsub.s32 %v1806, %v1808
          %v1810 = vrot.slane %v1796, %v1809
          %v1811 = vcombine.low %v1803, %v1810
          %v1813 = vunpack.c.l.s4 1966171168
          %v1814 = vunpack.c.0.s8 %v1813
          %v1815 = vlaneseq
          %v1816 = vshrl.u32 %v1815, 7
          %v1817 = vsub.s32 %v1814, %v1816
          %v1818 = vrot.slane %v1811, %v1817
          %v1820 = vmul.f32 %v1782, %v1818
          %v1821 = vld [vmem:[%s6] sm:$0xf]
          %v1823 = vlaneseq
          %v1824 = vshrl.u32 %v1823, 7
          %v1825 = vsub.s32 0, %v1824
          %v1826 = vrot.slane %v1820, %v1825
          %v1827 = vlaneseq
          %v1828 = vshrl.u32 %v1827, 7
          %v1829 = vsub.s32 1, %v1828
          %v1830 = vrot.slane %v1820, %v1829
          %v1831 = vlaneseq
          %v1832 = vshrl.u32 %v1831, 7
          %v1833 = vsub.s32 2, %v1832
          %v1834 = vrot.slane %v1820, %v1833
          %v1835 = vlaneseq
          %v1836 = vshrl.u32 %v1835, 7
          %v1837 = vsub.s32 3, %v1836
          %v1838 = vrot.slane %v1820, %v1837
          %v1843 = vmul.f32 %v1742, %v1826
          %v1844 = vmul.f32 %v1743, %v1830
          %v1845 = vmul.f32 %v1744, %v1834
          %v1846 = vmul.f32 %v1745, %v1838
          %v1851 = vcombine.low %v1843, %v1844
          %v1852 = vcombine.low %v1845, %v1846
          %v1854 = vunpack.c.l.s4 1966171168
          %v1855 = vunpack.c.0.s8 %v1854
          %v1856 = vlaneseq
          %v1857 = vshrl.u32 %v1856, 7
          %v1858 = vsub.s32 %v1855, %v1857
          %v1859 = vrot.slane %v1851, %v1858
          %v1861 = vunpack.c.l.s4 1966171168
          %v1862 = vunpack.c.0.s8 %v1861
          %v1863 = vlaneseq
          %v1864 = vshrl.u32 %v1863, 7
          %v1865 = vsub.s32 %v1862, %v1864
          %v1866 = vrot.slane %v1852, %v1865
          %v1867 = vcombine.low %v1859, %v1866
          %v1869 = vunpack.c.l.s4 1966171168
          %v1870 = vunpack.c.0.s8 %v1869
          %v1871 = vlaneseq
          %v1872 = vshrl.u32 %v1871, 7
          %v1873 = vsub.s32 %v1870, %v1872
          %v1874 = vrot.slane %v1867, %v1873
          %v1876 = vsub.f32 %v1821, %v1874
          %v1877 = vmul.f32 %v1629, %v1826
          %v1878 = vmul.f32 %v1631, %v1830
          %v1879 = vmul.f32 %v1711, %v1834
          %v1880 = vmul.f32 %v1713, %v1838
          %v1882 = vlaneseq
          %v1883 = vshrl.u32 %v1882, 7
          %v1884 = vsub.s32 0, %v1883
          %v1885 = vrot.slane %v1876, %v1884
          %v1886 = vlaneseq
          %v1887 = vshrl.u32 %v1886, 7
          %v1888 = vsub.s32 1, %v1887
          %v1889 = vrot.slane %v1876, %v1888
          %v1890 = vlaneseq
          %v1891 = vshrl.u32 %v1890, 7
          %v1892 = vsub.s32 2, %v1891
          %v1893 = vrot.slane %v1876, %v1892
          %v1894 = vlaneseq
          %v1895 = vshrl.u32 %v1894, 7
          %v1896 = vsub.s32 3, %v1895
          %v1897 = vrot.slane %v1876, %v1896
          %v1902 = vadd.f32 %v1877, %v1885
          %v1903 = vadd.f32 %v1878, %v1889
          %v1904 = vadd.f32 %v1879, %v1893
          %v1905 = vadd.f32 %v1880, %v1897
          %v1906 = vmax.f32 %v1902, 0.0
          %v1907 = vmax.f32 %v1903, 0.0
          %v1908 = vmax.f32 %v1904, 0.0
          %v1909 = vmax.f32 %v1905, 0.0
          %v1910 = vpack.c.bf16 %v1906, %v1906
          %v1911 = vpack.c.bf16 %v1907, %v1907
          %v1912 = vpack.c.bf16 %v1908, %v1908
          %v1913 = vpack.c.bf16 %v1909, %v1909
          %v1914 = vld [vmem:[#allocation6] sm:$0xf]
          %v1915 = vld [vmem:[#allocation6 + $0x4] sm:$0xf]
          %v1916 = vld [vmem:[#allocation6 + $0x8] sm:$0xf]
          %v1917 = vld [vmem:[#allocation6 + $0xc] sm:$0xf]
          %v1918 = vld [vmem:[#allocation6 + $0x10] sm:$0xf]
          %v1919 = vld [vmem:[#allocation6 + $0x14] sm:$0xf]
          %v1920 = vld [vmem:[#allocation6 + $0x18] sm:$0xf]
          %v1921 = vld [vmem:[#allocation6 + $0x1c] sm:$0xf]
          %v1922 = vld [vmem:[#allocation6 + $0x20] sm:$0xf]
          %v1923 = vld [vmem:[#allocation6 + $0x24] sm:$0xf]
          %v1924 = vld [vmem:[#allocation6 + $0x28] sm:$0xf]
          %v1925 = vld [vmem:[#allocation6 + $0x2c] sm:$0xf]
          %v1926 = vld [vmem:[#allocation6 + $0x30] sm:$0xf]
          %v1927 = vld [vmem:[#allocation6 + $0x34] sm:$0xf]
          %v1928 = vld [vmem:[#allocation6 + $0x38] sm:$0xf]
          %v1929 = vld [vmem:[#allocation6 + $0x3c] sm:$0xf]
          %v1930 = vld [vmem:[#allocation6 + $0x40] sm:$0xf]
          %v1931 = vld [vmem:[#allocation6 + $0x44] sm:$0xf]
          %v1932 = vld [vmem:[#allocation6 + $0x48] sm:$0xf]
          %v1933 = vld [vmem:[#allocation6 + $0x4c] sm:$0xf]
          %v1934 = vld [vmem:[#allocation6 + $0x50] sm:$0xf]
          %v1935 = vld [vmem:[#allocation6 + $0x54] sm:$0xf]
          %v1936 = vld [vmem:[#allocation6 + $0x58] sm:$0xf]
          %v1937 = vld [vmem:[#allocation6 + $0x5c] sm:$0xf]
          %v1938 = vld [vmem:[#allocation6 + $0x60] sm:$0xf]
          %v1939 = vld [vmem:[#allocation6 + $0x64] sm:$0xf]
          %v1940 = vld [vmem:[#allocation6 + $0x68] sm:$0xf]
          %v1941 = vld [vmem:[#allocation6 + $0x6c] sm:$0xf]
          %v1942 = vld [vmem:[#allocation6 + $0x70] sm:$0xf]
          %v1943 = vld [vmem:[#allocation6 + $0x74] sm:$0xf]
          %v1944 = vld [vmem:[#allocation6 + $0x78] sm:$0xf]
          %v1945 = vld [vmem:[#allocation6 + $0x7c] sm:$0xf]
          %v1946 = vld [vmem:[#allocation6 + $0x80] sm:$0xf]
          %v1947 = vld [vmem:[#allocation6 + $0x84] sm:$0xf]
          %v1948 = vld [vmem:[#allocation6 + $0x88] sm:$0xf]
          %v1949 = vld [vmem:[#allocation6 + $0x8c] sm:$0xf]
          %v1950 = vld [vmem:[#allocation6 + $0x90] sm:$0xf]
          %v1951 = vld [vmem:[#allocation6 + $0x94] sm:$0xf]
          %v1952 = vld [vmem:[#allocation6 + $0x98] sm:$0xf]
          %v1953 = vld [vmem:[#allocation6 + $0x9c] sm:$0xf]
          %v1954 = vld [vmem:[#allocation6 + $0xa0] sm:$0xf]
          %v1955 = vld [vmem:[#allocation6 + $0xa4] sm:$0xf]
          %v1956 = vld [vmem:[#allocation6 + $0xa8] sm:$0xf]
          %v1957 = vld [vmem:[#allocation6 + $0xac] sm:$0xf]
          %v1958 = vld [vmem:[#allocation6 + $0xb0] sm:$0xf]
          %v1959 = vld [vmem:[#allocation6 + $0xb4] sm:$0xf]
          %v1960 = vld [vmem:[#allocation6 + $0xb8] sm:$0xf]
          %v1961 = vld [vmem:[#allocation6 + $0xbc] sm:$0xf]
          %v1962 = vld [vmem:[#allocation6 + $0xc0] sm:$0xf]
          %v1963 = vld [vmem:[#allocation6 + $0xc4] sm:$0xf]
          %v1964 = vld [vmem:[#allocation6 + $0xc8] sm:$0xf]
          %v1965 = vld [vmem:[#allocation6 + $0xcc] sm:$0xf]
          %v1966 = vld [vmem:[#allocation6 + $0xd0] sm:$0xf]
          %v1967 = vld [vmem:[#allocation6 + $0xd4] sm:$0xf]
          %v1968 = vld [vmem:[#allocation6 + $0xd8] sm:$0xf]
          %v1969 = vld [vmem:[#allocation6 + $0xdc] sm:$0xf]
          %v1970 = vld [vmem:[#allocation6 + $0xe0] sm:$0xf]
          %v1971 = vld [vmem:[#allocation6 + $0xe4] sm:$0xf]
          %v1972 = vld [vmem:[#allocation6 + $0xe8] sm:$0xf]
          %v1973 = vld [vmem:[#allocation6 + $0xec] sm:$0xf]
          %v1974 = vld [vmem:[#allocation6 + $0xf0] sm:$0xf]
          %v1975 = vld [vmem:[#allocation6 + $0xf4] sm:$0xf]
          %v1976 = vld [vmem:[#allocation6 + $0xf8] sm:$0xf]
          %v1977 = vld [vmem:[#allocation6 + $0xfc] sm:$0xf]
          %v1978 = vld [vmem:[%s8] sm:$0x1]
          %v1980 = vlaneseq
          %v1981 = vshrl.u32 %v1980, 7
          %v1982 = vsub.s32 0, %v1981
          %v1983 = vrot.slane %v1978, %v1982
          %v2049 = vunpack.c.l.b16 %v1914
          %v2050 = vunpack.c.l.b16 %v1915
          %v2051 = vunpack.c.l.b16 %v1916
          %v2052 = vunpack.c.l.b16 %v1917
          %v2053 = vunpack.c.l.b16 %v1918
          %v2054 = vunpack.c.l.b16 %v1919
          %v2055 = vunpack.c.l.b16 %v1920
          %v2056 = vunpack.c.l.b16 %v1921
          %v2057 = vunpack.c.l.b16 %v1922
          %v2058 = vunpack.c.l.b16 %v1923
          %v2059 = vunpack.c.l.b16 %v1924
          %v2060 = vunpack.c.l.b16 %v1925
          %v2061 = vunpack.c.l.b16 %v1926
          %v2062 = vunpack.c.l.b16 %v1927
          %v2063 = vunpack.c.l.b16 %v1928
          %v2064 = vunpack.c.l.b16 %v1929
          %v2065 = vunpack.c.l.b16 %v1930
          %v2066 = vunpack.c.l.b16 %v1931
          %v2067 = vunpack.c.l.b16 %v1932
          %v2068 = vunpack.c.l.b16 %v1933
          %v2069 = vunpack.c.l.b16 %v1934
          %v2070 = vunpack.c.l.b16 %v1935
          %v2071 = vunpack.c.l.b16 %v1936
          %v2072 = vunpack.c.l.b16 %v1937
          %v2073 = vunpack.c.l.b16 %v1938
          %v2074 = vunpack.c.l.b16 %v1939
          %v2075 = vunpack.c.l.b16 %v1940
          %v2076 = vunpack.c.l.b16 %v1941
          %v2077 = vunpack.c.l.b16 %v1942
          %v2078 = vunpack.c.l.b16 %v1943
          %v2079 = vunpack.c.l.b16 %v1944
          %v2080 = vunpack.c.l.b16 %v1945
          %v2081 = vunpack.c.l.b16 %v1946
          %v2082 = vunpack.c.l.b16 %v1947
          %v2083 = vunpack.c.l.b16 %v1948
          %v2084 = vunpack.c.l.b16 %v1949
          %v2085 = vunpack.c.l.b16 %v1950
          %v2086 = vunpack.c.l.b16 %v1951
          %v2087 = vunpack.c.l.b16 %v1952
          %v2088 = vunpack.c.l.b16 %v1953
          %v2089 = vunpack.c.l.b16 %v1954
          %v2090 = vunpack.c.l.b16 %v1955
          %v2091 = vunpack.c.l.b16 %v1956
          %v2092 = vunpack.c.l.b16 %v1957
          %v2093 = vunpack.c.l.b16 %v1958
          %v2094 = vunpack.c.l.b16 %v1959
          %v2095 = vunpack.c.l.b16 %v1960
          %v2096 = vunpack.c.l.b16 %v1961
          %v2097 = vunpack.c.l.b16 %v1962
          %v2098 = vunpack.c.l.b16 %v1963
          %v2099 = vunpack.c.l.b16 %v1964
          %v2100 = vunpack.c.l.b16 %v1965
          %v2101 = vunpack.c.l.b16 %v1966
          %v2102 = vunpack.c.l.b16 %v1967
          %v2103 = vunpack.c.l.b16 %v1968
          %v2104 = vunpack.c.l.b16 %v1969
          %v2105 = vunpack.c.l.b16 %v1970
          %v2106 = vunpack.c.l.b16 %v1971
          %v2107 = vunpack.c.l.b16 %v1972
          %v2108 = vunpack.c.l.b16 %v1973
          %v2109 = vunpack.c.l.b16 %v1974
          %v2110 = vunpack.c.l.b16 %v1975
          %v2111 = vunpack.c.l.b16 %v1976
          %v2112 = vunpack.c.l.b16 %v1977
          %v2113 = vpack.c.b16 %v2050, %v2049
          %v2114 = vpack.c.b16 %v2052, %v2051
          %v2115 = vpack.c.b16 %v2054, %v2053
          %v2116 = vpack.c.b16 %v2056, %v2055
          %v2117 = vpack.c.b16 %v2058, %v2057
          %v2118 = vpack.c.b16 %v2060, %v2059
          %v2119 = vpack.c.b16 %v2062, %v2061
          %v2120 = vpack.c.b16 %v2064, %v2063
          %v2121 = vpack.c.b16 %v2066, %v2065
          %v2122 = vpack.c.b16 %v2068, %v2067
          %v2123 = vpack.c.b16 %v2070, %v2069
          %v2124 = vpack.c.b16 %v2072, %v2071
          %v2125 = vpack.c.b16 %v2074, %v2073
          %v2126 = vpack.c.b16 %v2076, %v2075
          %v2127 = vpack.c.b16 %v2078, %v2077
          %v2128 = vpack.c.b16 %v2080, %v2079
          %v2129 = vpack.c.b16 %v2082, %v2081
          %v2130 = vpack.c.b16 %v2084, %v2083
          %v2131 = vpack.c.b16 %v2086, %v2085
          %v2132 = vpack.c.b16 %v2088, %v2087
          %v2133 = vpack.c.b16 %v2090, %v2089
          %v2134 = vpack.c.b16 %v2092, %v2091
          %v2135 = vpack.c.b16 %v2094, %v2093
          %v2136 = vpack.c.b16 %v2096, %v2095
          %v2137 = vpack.c.b16 %v2098, %v2097
          %v2138 = vpack.c.b16 %v2100, %v2099
          %v2139 = vpack.c.b16 %v2102, %v2101
          %v2140 = vpack.c.b16 %v2104, %v2103
          %v2141 = vpack.c.b16 %v2106, %v2105
          %v2142 = vpack.c.b16 %v2108, %v2107
          %v2143 = vpack.c.b16 %v2110, %v2109
          %v2144 = vpack.c.b16 %v2112, %v2111
          %2177 = vmatprep.subr.bf16.mxu0 0
          %2178 = vmatpush1.bf16.msra.mxu0 %v2113
          %2179 = vmatprep.subr.bf16.mxu0 0
          %2180 = vmatpush1.bf16.msra.mxu0 %v2114
          %2181 = vmatprep.subr.bf16.mxu0 0
          %2182 = vmatpush1.bf16.msra.mxu0 %v2115
          %2183 = vmatprep.subr.bf16.mxu0 0
          %2184 = vmatpush1.bf16.msra.mxu0 %v2116
          %2185 = vmatprep.subr.bf16.mxu0 0
          %2186 = vmatpush1.bf16.msra.mxu0 %v2117
          %2187 = vmatprep.subr.bf16.mxu0 0
          %2188 = vmatpush1.bf16.msra.mxu0 %v2118
          %2189 = vmatprep.subr.bf16.mxu0 0
          %2190 = vmatpush1.bf16.msra.mxu0 %v2119
          %2191 = vmatprep.subr.bf16.mxu0 0
          %2192 = vmatpush1.bf16.msra.mxu0 %v2120
          %2193 = vmatprep.subr.bf16.mxu0 0
          %2194 = vmatpush1.bf16.msra.mxu0 %v2121
          %2195 = vmatprep.subr.bf16.mxu0 0
          %2196 = vmatpush1.bf16.msra.mxu0 %v2122
          %2197 = vmatprep.subr.bf16.mxu0 0
          %2198 = vmatpush1.bf16.msra.mxu0 %v2123
          %2199 = vmatprep.subr.bf16.mxu0 0
          %2200 = vmatpush1.bf16.msra.mxu0 %v2124
          %2201 = vmatprep.subr.bf16.mxu0 0
          %2202 = vmatpush1.bf16.msra.mxu0 %v2125
          %2203 = vmatprep.subr.bf16.mxu0 0
          %2204 = vmatpush1.bf16.msra.mxu0 %v2126
          %2205 = vmatprep.subr.bf16.mxu0 0
          %2206 = vmatpush1.bf16.msra.mxu0 %v2127
          %2207 = vmatprep.subr.bf16.mxu0 0
          %2208 = vmatpush1.bf16.msra.mxu0 %v2128
          %2209 = vmatprep.mubr.bf16.mxu0 %v1911
          %2210 = vmatmul.mubr.bf16.gmra.mrb[0].mxu0 %v1910
          %v2211 = vpop.f32.mrb[0].mxu0
          %v2212 = vadd.f32 %v1983, %v2211
          %v2213 = vpop.f32.mrb[0].mxu0
          %v2214 = vpop.f32.mrb[0].mxu0
          %v2215 = vpop.f32.mrb[0].mxu0
          %2216 = vdwg.mxu0
          %2217 = vmatprep.subr.bf16.mxu0 0
          %2218 = vmatpush1.bf16.msra.mxu0 %v2129
          %2219 = vmatprep.subr.bf16.mxu0 0
          %2220 = vmatpush1.bf16.msra.mxu0 %v2130
          %2221 = vmatprep.subr.bf16.mxu0 0
          %2222 = vmatpush1.bf16.msra.mxu0 %v2131
          %2223 = vmatprep.subr.bf16.mxu0 0
          %2224 = vmatpush1.bf16.msra.mxu0 %v2132
          %2225 = vmatprep.subr.bf16.mxu0 0
          %2226 = vmatpush1.bf16.msra.mxu0 %v2133
          %2227 = vmatprep.subr.bf16.mxu0 0
          %2228 = vmatpush1.bf16.msra.mxu0 %v2134
          %2229 = vmatprep.subr.bf16.mxu0 0
          %2230 = vmatpush1.bf16.msra.mxu0 %v2135
          %2231 = vmatprep.subr.bf16.mxu0 0
          %2232 = vmatpush1.bf16.msra.mxu0 %v2136
          %2233 = vmatprep.subr.bf16.mxu0 0
          %2234 = vmatpush1.bf16.msra.mxu0 %v2137
          %2235 = vmatprep.subr.bf16.mxu0 0
          %2236 = vmatpush1.bf16.msra.mxu0 %v2138
          %2237 = vmatprep.subr.bf16.mxu0 0
          %2238 = vmatpush1.bf16.msra.mxu0 %v2139
          %2239 = vmatprep.subr.bf16.mxu0 0
          %2240 = vmatpush1.bf16.msra.mxu0 %v2140
          %2241 = vmatprep.subr.bf16.mxu0 0
          %2242 = vmatpush1.bf16.msra.mxu0 %v2141
          %2243 = vmatprep.subr.bf16.mxu0 0
          %2244 = vmatpush1.bf16.msra.mxu0 %v2142
          %2245 = vmatprep.subr.bf16.mxu0 0
          %2246 = vmatpush1.bf16.msra.mxu0 %v2143
          %2247 = vmatprep.subr.bf16.mxu0 0
          %2248 = vmatpush1.bf16.msra.mxu0 %v2144
          %2249 = vmatprep.mubr.bf16.mxu0 %v1913
          %2250 = vmatmul.mubr.bf16.gmra.mrb[0].mxu0 %v1912
          %v2251 = vpop.f32.mrb[0].mxu0
          %v2252 = vadd.f32 %v2212, %v2251
          %v2253 = vpop.f32.mrb[0].mxu0
          %v2254 = vpop.f32.mrb[0].mxu0
          %v2255 = vpop.f32.mrb[0].mxu0
          %2256 = vdwg.mxu0
          %2257 = vst [vmem:[%s9] sm:$0xff] %v2252
          %v2258 = vlaneseq
          %v2259 = vand.u32 %v2258, 127
          %vm2260 = vcmp.lt.s32.totalorder %v2259, 4
          %v2261 = vsel %vm2260, %v2252, -1e+30
          %2262 = vmax.xlane.f32.xlu0 %v2261
          %v2263 = vpop.xlane.xlu0 %2262
          %v2264 = vsub.f32 %v2261, %v2263
          %v2265 = vmul.f32 %v2264, 1.442695
          %v2266 = vpow.pop %v2265
          %v2267 = vsel %vm2260, %v2266, 0.0
          %2268 = vadd.xlane.f32.xlu0 %v2267
          %v2269 = vpop.xlane.xlu0 %2268
          %v2270 = vrcp.pop %v2269
          %v2271 = vmul.f32 %v2267, %v2270
          %2272 = vst [vmem:[%s10] sm:$0xff] %v2271
        $region113: #{head_forward.1} parent=92 // pred_fallthru
          _
        // Predicated region
        $region114: #{head_forward.1} parent=92 // pred_check
          %p2273 = pneg %p231
        $region115: #{head_forward.1} parent=92 // pred_check_branch
          %2275 = sbr.rel (%p2273) target = $region117
        $region116: #{head_forward.1} parent=92 // pred_region
          _
        $region117: #{head_forward.1} parent=92 // pred_fallthru
          _
        // Predicated region
        $region118: #{head_forward.1} parent=92 // pred_check
          %p2276 = pneg %p252
        $region119: #{head_forward.1} parent=92 // pred_check_branch
          %2278 = sbr.rel (%p2276) target = $region121
        $region120: #{head_forward.1} parent=92 // pred_region
          _
        $region121: #{head_forward.1} parent=92 // pred_fallthru
          _
        // Predicated region
        $region122: #{head_forward.1} parent=92 // pred_check
          %p2279 = pneg %p231
        $region123: #{head_forward.1} parent=92 // pred_check_branch
          %2281 = sbr.rel (%p2279) target = $region125
        $region124: #{head_forward.1} parent=92 // pred_region
          _
        $region125: #{head_forward.1} parent=92 // pred_fallthru
          _
        // Predicated region
        $region126: #{head_forward.1} parent=92 // pred_check
          %p2282 = pneg %p252
        $region127: #{head_forward.1} parent=92 // pred_check_branch
          %2284 = sbr.rel (%p2282) target = $region129
        $region128: #{head_forward.1} parent=92 // pred_region
          _
        $region129: #{head_forward.1} parent=92 // pred_fallthru
          _
      $region93: #{head_forward.1} parent=5 // pred_fallthru
        _
      %p2285 = scmp.le.s32.totalorder 2, %s19
      // Predicated region
      $region130: #{head_forward.1} parent=5 // pred_check
        %p2286 = pneg %p2285
      $region131: #{head_forward.1} parent=5 // pred_check_branch
        %2288 = sbr.rel (%p2286) target = $region133
      $region132: #{head_forward.1} parent=5 // pred_region
        %s2289 = ssub.s32 %s19, 2
      $region133: #{head_forward.1} parent=5 // pred_fallthru
        _
    $region6: #{head_forward.1} parent=1 // loop_footer
      %s23 = sadd.s32 1, %s19
    $region7: #{head_forward.1} parent=1 // loop_footer_branch
      %18 = sbr.rel target = $region3
    $region8: #{head_forward.1} parent=1 // loop_exit
      _
    %2290 = vsyncpa [#allocation5], 1
    %s2291 = scalar_lea.sflag [#allocation5], 1
    %2292 = vsyncpa %s2291, 1
    %2293 = vsyncpa [#allocation7], 1

</llo_original>
